<compile_context>
chip_gen: v5e
topology: v5e:2x2
jax: 0.10.0
libtpu: 0.0.40
codegen_flags: <defaults>
</compile_context>

<pallas_src>
import functools

import jax
import jax.numpy as jnp
from jax import lax
from jax.experimental import pallas as pl
from jax.experimental.pallas import tpu as pltpu


# --------------------------- host-side weight prep ---------------------------

def fold_bn(gamma, beta, mean, var, eps=1e-5):
    scale = gamma / jnp.sqrt(var + eps)
    bias = beta - mean * scale
    return scale, bias


def _up_matrix(in_size, out_size):
    """(out, in) matrix of a 1-D bilinear resize with align_corners=True."""
    if in_size == 1:
        return jnp.ones((out_size, 1), jnp.float32)
    coords = (jnp.arange(out_size, dtype=jnp.float32)
              * (in_size - 1) / (out_size - 1))
    i0 = jnp.floor(coords).astype(jnp.int32)
    i1 = jnp.minimum(i0 + 1, in_size - 1)
    frac = coords - i0.astype(jnp.float32)
    rows = jnp.arange(out_size)
    m = jnp.zeros((out_size, in_size), jnp.float32)
    m = m.at[rows, i0].add(1.0 - frac)
    m = m.at[rows, i1].add(frac)
    return m


def prepare_up_params(params, eps=1e-5):
    """Fold reduce_ch (1x1), the channel concat and the BN scales into per-tap
    3x3 conv weights stored as (9, Cout_tap, Cin_tap) - the kernel computes
    each conv as  sum_tap  W_tap @ shifted_activations  (channel-major)."""
    w_reduce = params["w_reduce"].astype(jnp.float32)          # (C1, C1r)
    w1 = params["w1"].astype(jnp.float32)                       # (3,3,C2+C1r,Cmid)
    w2 = params["w2"].astype(jnp.float32)                       # (3,3,Cmid,Cout)
    C1, C1r = w_reduce.shape
    C2 = w1.shape[2] - C1r
    Cmid, Cout = w1.shape[3], w2.shape[3]

    s1, b1 = fold_bn(params["g1"], params["be1"], params["m1"], params["v1"], eps)
    s2, b2 = fold_bn(params["g2"], params["be2"], params["m2"], params["v2"], eps)

    # x2 path of conv1: (3,3,C2,Cmid) -> (9, Cmid, C2); BN1 scale folded on Cmid
    w1x2 = (jnp.transpose(w1[:, :, :C2, :], (0, 1, 3, 2))
            .reshape(9, Cmid, C2) * s1[None, :, None])
    # x1 path of conv1 composed with reduce_ch: (9, Cmid, C1)
    w1x1 = (jnp.einsum("cr,hwrm->hwmc", w_reduce, w1[:, :, C2:, :])
            .reshape(9, Cmid, C1) * s1[None, :, None])
    # conv2: (3,3,Cmid,Cout) -> (9, Cout, Cmid); BN2 scale folded on Cout
    w2t = (jnp.transpose(w2, (0, 1, 3, 2))
           .reshape(9, Cout, Cmid) * s2[None, :, None])

    return {
        "w1x2": w1x2,
        "w1x1": w1x1,
        "b1": b1.reshape(Cmid, 1).astype(jnp.float32),
        "w2t": w2t,
        "b2": b2.reshape(Cout, 1).astype(jnp.float32),
    }


# ------------------------------- fused kernel -------------------------------

def _up_fused_kernel(H2, W2, oy0, ox0,
                     x1_ref, x2_ref, mask_ref, uwt_ref, uh_ref,
                     w1x2_ref, w1x1_ref, b1_ref, w2t_ref, b2_ref, o_ref):
    f32 = jnp.float32
    W1 = x1_ref.shape[2]
    C2, HW = x2_ref.shape[1], x2_ref.shape[2]
    Wu = uwt_ref.shape[1]
    Hu, H1 = uh_ref.shape
    C1 = x1_ref.shape[1] // H1
    lead = W2 + 1                      # flat-canvas zero prefix/suffix length
    del W1                             # only needed for shapes

    # column-wrap masks (1, HW): kill w==0 for dx==0 taps, w==W2-1 for dx==2
    masks = (mask_ref[0:1, :], None, mask_ref[1:2, :])

    # ---- separable bilinear 2x upsample (align_corners=True), channel-major --
    xw = jnp.dot(x1_ref[0], uwt_ref[...],
                 preferred_element_type=f32)                   # (C1*H1, Wu)
    xw = xw.reshape(C1, H1, Wu)
    uh_b = jnp.broadcast_to(uh_ref[...], (C1, Hu, H1))
    x1u = jnp.einsum("bij,bjk->bik", uh_b, xw,
                     preferred_element_type=f32)               # (C1, Hu, Wu)

    # ---- F.pad placement of x1 inside the x2 frame (row-major flat) ----------
    if ox0 > 0 or (W2 - ox0 - Wu) > 0:
        x1u = jnp.concatenate(
            [jnp.zeros((C1, Hu, ox0), f32), x1u,
             jnp.zeros((C1, Hu, W2 - ox0 - Wu), f32)], axis=2)
    x1_flat = x1u.reshape(C1, Hu * W2)

    def flat_canvas(img, front, back):
        c = img.shape[0]
        return jnp.concatenate(
            [jnp.zeros((c, front), f32), img, jnp.zeros((c, back), f32)],
            axis=1)

    # canvas flat index of image pixel (h, w) is (h+1)*W2 + w + 1
    x2c = flat_canvas(x2_ref[0], lead, lead)
    x1c = flat_canvas(x1_flat, lead + oy0 * W2,
                      lead + (H2 - oy0 - Hu) * W2)

    def conv3x3(canvases, w_refs, bias):
        # bias: (Co, 1); canvases: (Ci, L) flat; w_refs: (9, Co, Ci) per tap.
        acc = bias
        for dx in range(3):
            part = None
            for dy in range(3):
                t, s = dy * 3 + dx, dy * W2 + dx
                for cv, wr in zip(canvases, w_refs):
                    term = jnp.dot(wr[t], cv[:, s:s + HW],
                                   preferred_element_type=f32)
                    part = term if part is None else part + term
            if masks[dx] is not None:
                part = part * masks[dx]
            acc = acc + part
        return jnp.maximum(acc, 0.0)                            # bias + ReLU

    # conv1: reduce_ch + concat + BN1 pre-folded into the two per-tap weights
    y = conv3x3((x2c, x1c), (w1x2_ref, w1x1_ref), b1_ref[...])  # (Cmid, HW)
    # conv2
    z = conv3x3((flat_canvas(y, lead, lead),), (w2t_ref,),
                b2_ref[...])                                     # (Cout, HW)
    o_ref[0] = z.astype(o_ref.dtype)


# ----------------------------- Up forward (Pallas) -----------------------------

def up_forward(x1_nchw, x2_nchw, prep):
    """Up(in_channels, out_channels, bilinear=True, light_attention=False)."""
    N, C1, H1, W1 = x1_nchw.shape
    _, C2, H2, W2 = x2_nchw.shape
    Hu, Wu = 2 * H1, 2 * W1
    diffY, diffX = H2 - Hu, W2 - Wu
    if diffY < 0 or diffX < 0:
        # TODO(synk): negative-pad (cropping) path of F.pad is not supported.
        raise ValueError("Up kernel requires x2 spatial >= upsampled x1 spatial")
    oy0, ox0 = diffY // 2, diffX // 2
    HW = H2 * W2
    Cmid = prep["b1"].shape[0]
    Cout = prep["b2"].shape[0]

    # Free (metadata-only) reshapes: channel-major, flattened spatial on lanes.
    x1f = x1_nchw.reshape(N, C1 * H1, W1).astype(jnp.float32)
    x2f = x2_nchw.reshape(N, C2, HW).astype(jnp.float32)

    # Separable 1-D upsample matrices (O(H^2)+O(W^2), not the O((HW)^2) kron).
    uwt = _up_matrix(W1, Wu).T                                   # (W1, Wu)
    uh = _up_matrix(H1, Hu)                                      # (Hu, H1)

    # Conv column-wrap masks over the row-major flat spatial axis.
    col = jnp.arange(HW, dtype=jnp.int32) % W2
    masks = jnp.stack([(col != 0), (col != W2 - 1)]).astype(jnp.float32)

    kernel = functools.partial(_up_fused_kernel, H2, W2, oy0, ox0)

    out = pl.pallas_call(
        kernel,
        out_shape=jax.ShapeDtypeStruct((N, Cout, HW), jnp.float32),
        grid=(N,),
        in_specs=[
            pl.BlockSpec((1, C1 * H1, W1), lambda n: (n, 0, 0)),
            pl.BlockSpec((1, C2, HW), lambda n: (n, 0, 0)),
            pl.BlockSpec((2, HW), lambda n: (0, 0)),
            pl.BlockSpec((W1, Wu), lambda n: (0, 0)),
            pl.BlockSpec((Hu, H1), lambda n: (0, 0)),
            pl.BlockSpec((9, Cmid, C2), lambda n: (0, 0, 0)),
            pl.BlockSpec((9, Cmid, C1), lambda n: (0, 0, 0)),
            pl.BlockSpec((Cmid, 1), lambda n: (0, 0)),
            pl.BlockSpec((9, Cout, Cmid), lambda n: (0, 0, 0)),
            pl.BlockSpec((Cout, 1), lambda n: (0, 0)),
        ],
        out_specs=pl.BlockSpec((1, Cout, HW), lambda n: (n, 0, 0)),
        compiler_params=pltpu.CompilerParams(
            dimension_semantics=("parallel",)),
    )(x1f, x2f, masks, uwt, uh,
      prep["w1x2"], prep["w1x1"], prep["b1"], prep["w2t"], prep["b2"])

    # (N, Cout, H*W) -> (N, Cout, H, W): free reshape, already NCHW.
    return out.reshape(N, Cout, H2, W2)


# ------------------------------- JAX reference -------------------------------

def bilinear_up2x_align_corners(x_nhwc):
    def interp_axis(x, axis, in_size):
        out_size = 2 * in_size
        if in_size == 1:
            reps = [1] * x.ndim
            reps[axis] = out_size
            return jnp.tile(x, reps)
        coords = jnp.arange(out_size) * (in_size - 1) / (out_size - 1)
        i0 = jnp.floor(coords).astype(jnp.int32)
        i1 = jnp.minimum(i0 + 1, in_size - 1)
        frac = (coords - i0).astype(x.dtype)
        x0 = jnp.take(x, i0, axis=axis)
        x1 = jnp.take(x, i1, axis=axis)
        shape = [1] * x.ndim
        shape[axis] = out_size
        frac = frac.reshape(shape)
        return x0 * (1.0 - frac) + x1 * frac

    x = interp_axis(x_nhwc, 1, x_nhwc.shape[1])
    x = interp_axis(x, 2, x.shape[2])
    return x


def up_forward_ref(x1_nchw, x2_nchw, params):
    x1 = jnp.transpose(x1_nchw, (0, 2, 3, 1)).astype(jnp.float32)
    x2 = jnp.transpose(x2_nchw, (0, 2, 3, 1)).astype(jnp.float32)
    x1 = bilinear_up2x_align_corners(x1)
    diffY = x2.shape[1] - x1.shape[1]
    diffX = x2.shape[2] - x1.shape[2]
    x1 = jnp.pad(x1, ((0, 0), (diffY // 2, diffY - diffY // 2),
                      (diffX // 2, diffX - diffX // 2), (0, 0)))
    x1 = jnp.einsum("nhwc,cd->nhwd", x1, params["w_reduce"])
    x = jnp.concatenate([x2, x1], axis=-1)

    def cbr(x, w, g, be, m, v):
        y = lax.conv_general_dilated(
            x, w, (1, 1), "SAME",
            dimension_numbers=("NHWC", "HWIO", "NHWC"))
        y = (y - m) / jnp.sqrt(v + 1e-5) * g + be
        return jnp.maximum(y, 0.0)

    y = cbr(x, params["w1"], params["g1"], params["be1"],
            params["m1"], params["v1"])
    y = cbr(y, params["w2"], params["g2"], params["be2"],
            params["m2"], params["v2"])
    return jnp.transpose(y, (0, 3, 1, 2))


# ---------------------------------- main ----------------------------------

if __name__ == "__main__":
    key = jax.random.PRNGKey(0)
    ks = jax.random.split(key, 12)

    # Up(in_channels=8, out_channels=4, bilinear=True, light_attention=False)
    in_channels, out_channels = 8, 4
    mid_channels = in_channels // 2          # DoubleConv mid
    N, H1, W1 = 2, 8, 8                      # x1 spatial (pre-upsample)
    H2, W2 = 16, 16                          # x2 spatial

    x1 = jax.random.normal(ks[0], (N, in_channels, H1, W1), jnp.float32)
    x2 = jax.random.normal(ks[1], (N, in_channels // 2, H2, W2), jnp.float32)

    params = {
        # reduce_ch: 1x1 conv in_channels -> in_channels//2, stored as (Cin, Cout)
        "w_reduce": 0.2 * jax.random.normal(
            ks[2], (in_channels, in_channels // 2), jnp.float32),
        # DoubleConv conv1: 3x3, (in_channels -> mid_channels), HWIO
        "w1": 0.2 * jax.random.normal(
            ks[3], (3, 3, in_channels, mid_channels), jnp.float32),
        "g1": 1.0 + 0.1 * jax.random.normal(ks[4], (mid_channels,), jnp.float32),
        "be1": 0.1 * jax.random.normal(ks[5], (mid_channels,), jnp.float32),
        "m1": 0.1 * jax.random.normal(ks[6], (mid_channels,), jnp.float32),
        "v1": jax.random.uniform(ks[7], (mid_channels,), jnp.float32, 0.5, 1.5),
        # DoubleConv conv2: 3x3, (mid_channels -> out_channels), HWIO
        "w2": 0.2 * jax.random.normal(
            ks[8], (3, 3, mid_channels, out_channels), jnp.float32),
        "g2": 1.0 + 0.1 * jax.random.normal(ks[9], (out_channels,), jnp.float32),
        "be2": 0.1 * jax.random.normal(ks[10], (out_channels,), jnp.float32),
        "m2": 0.1 * jax.random.normal(ks[11], (out_channels,), jnp.float32),
        "v2": jnp.linspace(0.6, 1.4, out_channels, dtype=jnp.float32),
    }

    prep = prepare_up_params(params)                 # offline weight folding
    up_jit = jax.jit(up_forward)

    out = jax.block_until_ready(up_jit(x1, x2, prep))
    ref = jax.block_until_ready(up_forward_ref(x1, x2, params))

    assert out.shape == (N, out_channels, H2, W2), out.shape
    assert jnp.all(jnp.isfinite(out))
    assert jnp.allclose(out, ref, atol=1e-4, rtol=1e-4), float(
        jnp.max(jnp.abs(out - ref)))

    print("KERNEL_OK")
</pallas_src>

<mosaic_0001>
module attributes {stable_mosaic.version = 11 : i64} {
  func.func @_up_fused_kernel(%arg0: i32, %arg1: memref<1x64x8xf32, #tpu.memory_space<vmem>>, %arg2: memref<1x4x256xf32, #tpu.memory_space<vmem>>, %arg3: memref<2x256xf32, #tpu.memory_space<vmem>>, %arg4: memref<8x16xf32, #tpu.memory_space<vmem>>, %arg5: memref<16x8xf32, #tpu.memory_space<vmem>>, %arg6: memref<9x4x4xf32, #tpu.memory_space<vmem>>, %arg7: memref<9x4x8xf32, #tpu.memory_space<vmem>>, %arg8: memref<4x1xf32, #tpu.memory_space<vmem>>, %arg9: memref<9x4x4xf32, #tpu.memory_space<vmem>>, %arg10: memref<4x1xf32, #tpu.memory_space<vmem>>, %arg11: memref<1x4x256xf32, #tpu.memory_space<vmem>>) attributes {dimension_semantics = [#tpu.dimension_semantics<parallel>], iteration_bounds = array<i64: 2>, scalar_prefetch = 0 : i64, scratch_operands = 0 : i64, tpu.core_type = #tpu.core_type<tc>, window_params = [{transform_indices = @transform_0, window_bounds = array<i64: 1, 64, 8>}, {transform_indices = @transform_1, window_bounds = array<i64: 1, 4, 256>}, {pipeline_mode = #tpu.pipeline_mode<synchronous>, transform_indices = @transform_2, window_bounds = array<i64: 2, 256>}, {pipeline_mode = #tpu.pipeline_mode<synchronous>, transform_indices = @transform_3, window_bounds = array<i64: 8, 16>}, {pipeline_mode = #tpu.pipeline_mode<synchronous>, transform_indices = @transform_4, window_bounds = array<i64: 16, 8>}, {pipeline_mode = #tpu.pipeline_mode<synchronous>, transform_indices = @transform_5, window_bounds = array<i64: 9, 4, 4>}, {pipeline_mode = #tpu.pipeline_mode<synchronous>, transform_indices = @transform_6, window_bounds = array<i64: 9, 4, 8>}, {pipeline_mode = #tpu.pipeline_mode<synchronous>, transform_indices = @transform_7, window_bounds = array<i64: 4, 1>}, {pipeline_mode = #tpu.pipeline_mode<synchronous>, transform_indices = @transform_8, window_bounds = array<i64: 9, 4, 4>}, {pipeline_mode = #tpu.pipeline_mode<synchronous>, transform_indices = @transform_9, window_bounds = array<i64: 4, 1>}, {transform_indices = @transform_10, window_bounds = array<i64: 1, 4, 256>}]} {
    %c0 = arith.constant 0 : index
    %c0_0 = arith.constant 0 : index
    %0 = vector.load %arg3[%c0, %c0_0] : memref<2x256xf32, #tpu.memory_space<vmem>>, vector<1x256xf32>
    %c1 = arith.constant 1 : index
    %c0_1 = arith.constant 0 : index
    %1 = vector.load %arg3[%c1, %c0_1] : memref<2x256xf32, #tpu.memory_space<vmem>>, vector<1x256xf32>
    %c0_2 = arith.constant 0 : index
    %c0_3 = arith.constant 0 : index
    %c0_4 = arith.constant 0 : index
    %2 = vector.load %arg1[%c0_2, %c0_3, %c0_4] : memref<1x64x8xf32, #tpu.memory_space<vmem>>, vector<1x64x8xf32>
    %3 = vector.shape_cast %2 : vector<1x64x8xf32> to vector<64x8xf32>
    %c0_5 = arith.constant 0 : index
    %c0_6 = arith.constant 0 : index
    %4 = vector.load %arg4[%c0_5, %c0_6] : memref<8x16xf32, #tpu.memory_space<vmem>>, vector<8x16xf32>
    %cst = arith.constant dense<0.000000e+00> : vector<64x16xf32>
    %5 = tpu.matmul %3, %4, %cst {dimension_numbers = #tpu.dot_dimension_numbers<[1], [0], [0], [1], [0, 0, 1, 1], [], []>} : vector<64x8xf32>, vector<8x16xf32>, vector<64x16xf32> -> vector<64x16xf32>
    %6 = vector.shape_cast %5 : vector<64x16xf32> to vector<8x8x16xf32>
    %c0_7 = arith.constant 0 : index
    %c0_8 = arith.constant 0 : index
    %7 = vector.load %arg5[%c0_7, %c0_8] : memref<16x8xf32, #tpu.memory_space<vmem>>, vector<16x8xf32>
    %8 = vector.shape_cast %7 : vector<16x8xf32> to vector<1x16x8xf32>
    %9 = vector.broadcast %8 : vector<1x16x8xf32> to vector<8x16x8xf32>
    "tpu.trace_start"() <{level = 10 : i32, message = "bij,bjk->bik"}> : () -> ()
    %cst_9 = arith.constant dense<0.000000e+00> : vector<8x16x16xf32>
    %10 = tpu.matmul %9, %6, %cst_9 {dimension_numbers = #tpu.dot_dimension_numbers<[2], [1], [1], [2], [0, 0, 0, 1, 1, 2], [0], [0]>} : vector<8x16x8xf32>, vector<8x8x16xf32>, vector<8x16x16xf32> -> vector<8x16x16xf32>
    "tpu.trace_stop"() : () -> ()
    %11 = vector.shape_cast %10 : vector<8x16x16xf32> to vector<8x256xf32>
    %c0_10 = arith.constant 0 : index
    %c0_11 = arith.constant 0 : index
    %c0_12 = arith.constant 0 : index
    %12 = vector.load %arg2[%c0_10, %c0_11, %c0_12] : memref<1x4x256xf32, #tpu.memory_space<vmem>>, vector<1x4x256xf32>
    %13 = vector.shape_cast %12 : vector<1x4x256xf32> to vector<4x256xf32>
    %cst_13 = arith.constant 0.000000e+00 : f32
    %14 = vector.broadcast %cst_13 : f32 to vector<4x17xf32>
    %cst_14 = arith.constant 0.000000e+00 : f32
    %15 = vector.broadcast %cst_14 : f32 to vector<4x17xf32>
    %16 = tpu.concatenate %14, %13, %15 in 1 : vector<4x17xf32>, vector<4x256xf32>, vector<4x17xf32> -> vector<4x290xf32>
    %cst_15 = arith.constant 0.000000e+00 : f32
    %17 = vector.broadcast %cst_15 : f32 to vector<8x17xf32>
    %cst_16 = arith.constant 0.000000e+00 : f32
    %18 = vector.broadcast %cst_16 : f32 to vector<8x17xf32>
    %19 = tpu.concatenate %17, %11, %18 in 1 : vector<8x17xf32>, vector<8x256xf32>, vector<8x17xf32> -> vector<8x290xf32>
    %c0_17 = arith.constant 0 : index
    %c0_18 = arith.constant 0 : index
    %20 = vector.load %arg8[%c0_17, %c0_18] : memref<4x1xf32, #tpu.memory_space<vmem>>, vector<4x1xf32>
    %c0_19 = arith.constant 0 : index
    %c0_20 = arith.constant 0 : index
    %c0_21 = arith.constant 0 : index
    %21 = vector.load %arg6[%c0_19, %c0_20, %c0_21] : memref<9x4x4xf32, #tpu.memory_space<vmem>>, vector<1x4x4xf32>
    %22 = vector.shape_cast %21 : vector<1x4x4xf32> to vector<4x4xf32>
    %23 = vector.extract_strided_slice %16 {offsets = [0, 0], sizes = [4, 256], strides = [1, 1]} : vector<4x290xf32> to vector<4x256xf32>
    %cst_22 = arith.constant dense<0.000000e+00> : vector<4x256xf32>
    %24 = tpu.matmul %22, %23, %cst_22 {dimension_numbers = #tpu.dot_dimension_numbers<[1], [0], [0], [1], [0, 0, 1, 1], [], []>} : vector<4x4xf32>, vector<4x256xf32>, vector<4x256xf32> -> vector<4x256xf32>
    %c0_23 = arith.constant 0 : index
    %c0_24 = arith.constant 0 : index
    %c0_25 = arith.constant 0 : index
    %25 = vector.load %arg7[%c0_23, %c0_24, %c0_25] : memref<9x4x8xf32, #tpu.memory_space<vmem>>, vector<1x4x8xf32>
    %26 = vector.shape_cast %25 : vector<1x4x8xf32> to vector<4x8xf32>
    %27 = vector.extract_strided_slice %19 {offsets = [0, 0], sizes = [8, 256], strides = [1, 1]} : vector<8x290xf32> to vector<8x256xf32>
    %cst_26 = arith.constant dense<0.000000e+00> : vector<4x256xf32>
    %28 = tpu.matmul %26, %27, %cst_26 {dimension_numbers = #tpu.dot_dimension_numbers<[1], [0], [0], [1], [0, 0, 1, 1], [], []>} : vector<4x8xf32>, vector<8x256xf32>, vector<4x256xf32> -> vector<4x256xf32>
    %29 = arith.addf %24, %28 : vector<4x256xf32>
    %c3 = arith.constant 3 : index
    %c0_27 = arith.constant 0 : index
    %c0_28 = arith.constant 0 : index
    %30 = vector.load %arg6[%c3, %c0_27, %c0_28] : memref<9x4x4xf32, #tpu.memory_space<vmem>>, vector<1x4x4xf32>
    %31 = vector.shape_cast %30 : vector<1x4x4xf32> to vector<4x4xf32>
    %32 = vector.extract_strided_slice %16 {offsets = [0, 16], sizes = [4, 256], strides = [1, 1]} : vector<4x290xf32> to vector<4x256xf32>
    %cst_29 = arith.constant dense<0.000000e+00> : vector<4x256xf32>
    %33 = tpu.matmul %31, %32, %cst_29 {dimension_numbers = #tpu.dot_dimension_numbers<[1], [0], [0], [1], [0, 0, 1, 1], [], []>} : vector<4x4xf32>, vector<4x256xf32>, vector<4x256xf32> -> vector<4x256xf32>
    %34 = arith.addf %29, %33 : vector<4x256xf32>
    %c3_30 = arith.constant 3 : index
    %c0_31 = arith.constant 0 : index
    %c0_32 = arith.constant 0 : index
    %35 = vector.load %arg7[%c3_30, %c0_31, %c0_32] : memref<9x4x8xf32, #tpu.memory_space<vmem>>, vector<1x4x8xf32>
    %36 = vector.shape_cast %35 : vector<1x4x8xf32> to vector<4x8xf32>
    %37 = vector.extract_strided_slice %19 {offsets = [0, 16], sizes = [8, 256], strides = [1, 1]} : vector<8x290xf32> to vector<8x256xf32>
    %cst_33 = arith.constant dense<0.000000e+00> : vector<4x256xf32>
    %38 = tpu.matmul %36, %37, %cst_33 {dimension_numbers = #tpu.dot_dimension_numbers<[1], [0], [0], [1], [0, 0, 1, 1], [], []>} : vector<4x8xf32>, vector<8x256xf32>, vector<4x256xf32> -> vector<4x256xf32>
    %39 = arith.addf %34, %38 : vector<4x256xf32>
    %c6 = arith.constant 6 : index
    %c0_34 = arith.constant 0 : index
    %c0_35 = arith.constant 0 : index
    %40 = vector.load %arg6[%c6, %c0_34, %c0_35] : memref<9x4x4xf32, #tpu.memory_space<vmem>>, vector<1x4x4xf32>
    %41 = vector.shape_cast %40 : vector<1x4x4xf32> to vector<4x4xf32>
    %42 = vector.extract_strided_slice %16 {offsets = [0, 32], sizes = [4, 256], strides = [1, 1]} : vector<4x290xf32> to vector<4x256xf32>
    %cst_36 = arith.constant dense<0.000000e+00> : vector<4x256xf32>
    %43 = tpu.matmul %41, %42, %cst_36 {dimension_numbers = #tpu.dot_dimension_numbers<[1], [0], [0], [1], [0, 0, 1, 1], [], []>} : vector<4x4xf32>, vector<4x256xf32>, vector<4x256xf32> -> vector<4x256xf32>
    %44 = arith.addf %39, %43 : vector<4x256xf32>
    %c6_37 = arith.constant 6 : index
    %c0_38 = arith.constant 0 : index
    %c0_39 = arith.constant 0 : index
    %45 = vector.load %arg7[%c6_37, %c0_38, %c0_39] : memref<9x4x8xf32, #tpu.memory_space<vmem>>, vector<1x4x8xf32>
    %46 = vector.shape_cast %45 : vector<1x4x8xf32> to vector<4x8xf32>
    %47 = vector.extract_strided_slice %19 {offsets = [0, 32], sizes = [8, 256], strides = [1, 1]} : vector<8x290xf32> to vector<8x256xf32>
    %cst_40 = arith.constant dense<0.000000e+00> : vector<4x256xf32>
    %48 = tpu.matmul %46, %47, %cst_40 {dimension_numbers = #tpu.dot_dimension_numbers<[1], [0], [0], [1], [0, 0, 1, 1], [], []>} : vector<4x8xf32>, vector<8x256xf32>, vector<4x256xf32> -> vector<4x256xf32>
    %49 = arith.addf %44, %48 : vector<4x256xf32>
    %50 = vector.broadcast %0 : vector<1x256xf32> to vector<4x256xf32>
    %51 = arith.mulf %49, %50 : vector<4x256xf32>
    %52 = vector.broadcast %20 : vector<4x1xf32> to vector<4x256xf32>
    %53 = arith.addf %52, %51 : vector<4x256xf32>
    %c1_41 = arith.constant 1 : index
    %c0_42 = arith.constant 0 : index
    %c0_43 = arith.constant 0 : index
    %54 = vector.load %arg6[%c1_41, %c0_42, %c0_43] : memref<9x4x4xf32, #tpu.memory_space<vmem>>, vector<1x4x4xf32>
    %55 = vector.shape_cast %54 : vector<1x4x4xf32> to vector<4x4xf32>
    %56 = vector.extract_strided_slice %16 {offsets = [0, 1], sizes = [4, 256], strides = [1, 1]} : vector<4x290xf32> to vector<4x256xf32>
    %cst_44 = arith.constant dense<0.000000e+00> : vector<4x256xf32>
    %57 = tpu.matmul %55, %56, %cst_44 {dimension_numbers = #tpu.dot_dimension_numbers<[1], [0], [0], [1], [0, 0, 1, 1], [], []>} : vector<4x4xf32>, vector<4x256xf32>, vector<4x256xf32> -> vector<4x256xf32>
    %c1_45 = arith.constant 1 : index
    %c0_46 = arith.constant 0 : index
    %c0_47 = arith.constant 0 : index
    %58 = vector.load %arg7[%c1_45, %c0_46, %c0_47] : memref<9x4x8xf32, #tpu.memory_space<vmem>>, vector<1x4x8xf32>
    %59 = vector.shape_cast %58 : vector<1x4x8xf32> to vector<4x8xf32>
    %60 = vector.extract_strided_slice %19 {offsets = [0, 1], sizes = [8, 256], strides = [1, 1]} : vector<8x290xf32> to vector<8x256xf32>
    %cst_48 = arith.constant dense<0.000000e+00> : vector<4x256xf32>
    %61 = tpu.matmul %59, %60, %cst_48 {dimension_numbers = #tpu.dot_dimension_numbers<[1], [0], [0], [1], [0, 0, 1, 1], [], []>} : vector<4x8xf32>, vector<8x256xf32>, vector<4x256xf32> -> vector<4x256xf32>
    %62 = arith.addf %57, %61 : vector<4x256xf32>
    %c4 = arith.constant 4 : index
    %c0_49 = arith.constant 0 : index
    %c0_50 = arith.constant 0 : index
    %63 = vector.load %arg6[%c4, %c0_49, %c0_50] : memref<9x4x4xf32, #tpu.memory_space<vmem>>, vector<1x4x4xf32>
    %64 = vector.shape_cast %63 : vector<1x4x4xf32> to vector<4x4xf32>
    %65 = vector.extract_strided_slice %16 {offsets = [0, 17], sizes = [4, 256], strides = [1, 1]} : vector<4x290xf32> to vector<4x256xf32>
    %cst_51 = arith.constant dense<0.000000e+00> : vector<4x256xf32>
    %66 = tpu.matmul %64, %65, %cst_51 {dimension_numbers = #tpu.dot_dimension_numbers<[1], [0], [0], [1], [0, 0, 1, 1], [], []>} : vector<4x4xf32>, vector<4x256xf32>, vector<4x256xf32> -> vector<4x256xf32>
    %67 = arith.addf %62, %66 : vector<4x256xf32>
    %c4_52 = arith.constant 4 : index
    %c0_53 = arith.constant 0 : index
    %c0_54 = arith.constant 0 : index
    %68 = vector.load %arg7[%c4_52, %c0_53, %c0_54] : memref<9x4x8xf32, #tpu.memory_space<vmem>>, vector<1x4x8xf32>
    %69 = vector.shape_cast %68 : vector<1x4x8xf32> to vector<4x8xf32>
    %70 = vector.extract_strided_slice %19 {offsets = [0, 17], sizes = [8, 256], strides = [1, 1]} : vector<8x290xf32> to vector<8x256xf32>
    %cst_55 = arith.constant dense<0.000000e+00> : vector<4x256xf32>
    %71 = tpu.matmul %69, %70, %cst_55 {dimension_numbers = #tpu.dot_dimension_numbers<[1], [0], [0], [1], [0, 0, 1, 1], [], []>} : vector<4x8xf32>, vector<8x256xf32>, vector<4x256xf32> -> vector<4x256xf32>
    %72 = arith.addf %67, %71 : vector<4x256xf32>
    %c7 = arith.constant 7 : index
    %c0_56 = arith.constant 0 : index
    %c0_57 = arith.constant 0 : index
    %73 = vector.load %arg6[%c7, %c0_56, %c0_57] : memref<9x4x4xf32, #tpu.memory_space<vmem>>, vector<1x4x4xf32>
    %74 = vector.shape_cast %73 : vector<1x4x4xf32> to vector<4x4xf32>
    %75 = vector.extract_strided_slice %16 {offsets = [0, 33], sizes = [4, 256], strides = [1, 1]} : vector<4x290xf32> to vector<4x256xf32>
    %cst_58 = arith.constant dense<0.000000e+00> : vector<4x256xf32>
    %76 = tpu.matmul %74, %75, %cst_58 {dimension_numbers = #tpu.dot_dimension_numbers<[1], [0], [0], [1], [0, 0, 1, 1], [], []>} : vector<4x4xf32>, vector<4x256xf32>, vector<4x256xf32> -> vector<4x256xf32>
    %77 = arith.addf %72, %76 : vector<4x256xf32>
    %c7_59 = arith.constant 7 : index
    %c0_60 = arith.constant 0 : index
    %c0_61 = arith.constant 0 : index
    %78 = vector.load %arg7[%c7_59, %c0_60, %c0_61] : memref<9x4x8xf32, #tpu.memory_space<vmem>>, vector<1x4x8xf32>
    %79 = vector.shape_cast %78 : vector<1x4x8xf32> to vector<4x8xf32>
    %80 = vector.extract_strided_slice %19 {offsets = [0, 33], sizes = [8, 256], strides = [1, 1]} : vector<8x290xf32> to vector<8x256xf32>
    %cst_62 = arith.constant dense<0.000000e+00> : vector<4x256xf32>
    %81 = tpu.matmul %79, %80, %cst_62 {dimension_numbers = #tpu.dot_dimension_numbers<[1], [0], [0], [1], [0, 0, 1, 1], [], []>} : vector<4x8xf32>, vector<8x256xf32>, vector<4x256xf32> -> vector<4x256xf32>
    %82 = arith.addf %77, %81 : vector<4x256xf32>
    %83 = arith.addf %53, %82 : vector<4x256xf32>
    %c2 = arith.constant 2 : index
    %c0_63 = arith.constant 0 : index
    %c0_64 = arith.constant 0 : index
    %84 = vector.load %arg6[%c2, %c0_63, %c0_64] : memref<9x4x4xf32, #tpu.memory_space<vmem>>, vector<1x4x4xf32>
    %85 = vector.shape_cast %84 : vector<1x4x4xf32> to vector<4x4xf32>
    %86 = vector.extract_strided_slice %16 {offsets = [0, 2], sizes = [4, 256], strides = [1, 1]} : vector<4x290xf32> to vector<4x256xf32>
    %cst_65 = arith.constant dense<0.000000e+00> : vector<4x256xf32>
    %87 = tpu.matmul %85, %86, %cst_65 {dimension_numbers = #tpu.dot_dimension_numbers<[1], [0], [0], [1], [0, 0, 1, 1], [], []>} : vector<4x4xf32>, vector<4x256xf32>, vector<4x256xf32> -> vector<4x256xf32>
    %c2_66 = arith.constant 2 : index
    %c0_67 = arith.constant 0 : index
    %c0_68 = arith.constant 0 : index
    %88 = vector.load %arg7[%c2_66, %c0_67, %c0_68] : memref<9x4x8xf32, #tpu.memory_space<vmem>>, vector<1x4x8xf32>
    %89 = vector.shape_cast %88 : vector<1x4x8xf32> to vector<4x8xf32>
    %90 = vector.extract_strided_slice %19 {offsets = [0, 2], sizes = [8, 256], strides = [1, 1]} : vector<8x290xf32> to vector<8x256xf32>
    %cst_69 = arith.constant dense<0.000000e+00> : vector<4x256xf32>
    %91 = tpu.matmul %89, %90, %cst_69 {dimension_numbers = #tpu.dot_dimension_numbers<[1], [0], [0], [1], [0, 0, 1, 1], [], []>} : vector<4x8xf32>, vector<8x256xf32>, vector<4x256xf32> -> vector<4x256xf32>
    %92 = arith.addf %87, %91 : vector<4x256xf32>
    %c5 = arith.constant 5 : index
    %c0_70 = arith.constant 0 : index
    %c0_71 = arith.constant 0 : index
    %93 = vector.load %arg6[%c5, %c0_70, %c0_71] : memref<9x4x4xf32, #tpu.memory_space<vmem>>, vector<1x4x4xf32>
    %94 = vector.shape_cast %93 : vector<1x4x4xf32> to vector<4x4xf32>
    %95 = vector.extract_strided_slice %16 {offsets = [0, 18], sizes = [4, 256], strides = [1, 1]} : vector<4x290xf32> to vector<4x256xf32>
    %cst_72 = arith.constant dense<0.000000e+00> : vector<4x256xf32>
    %96 = tpu.matmul %94, %95, %cst_72 {dimension_numbers = #tpu.dot_dimension_numbers<[1], [0], [0], [1], [0, 0, 1, 1], [], []>} : vector<4x4xf32>, vector<4x256xf32>, vector<4x256xf32> -> vector<4x256xf32>
    %97 = arith.addf %92, %96 : vector<4x256xf32>
    %c5_73 = arith.constant 5 : index
    %c0_74 = arith.constant 0 : index
    %c0_75 = arith.constant 0 : index
    %98 = vector.load %arg7[%c5_73, %c0_74, %c0_75] : memref<9x4x8xf32, #tpu.memory_space<vmem>>, vector<1x4x8xf32>
    %99 = vector.shape_cast %98 : vector<1x4x8xf32> to vector<4x8xf32>
    %100 = vector.extract_strided_slice %19 {offsets = [0, 18], sizes = [8, 256], strides = [1, 1]} : vector<8x290xf32> to vector<8x256xf32>
    %cst_76 = arith.constant dense<0.000000e+00> : vector<4x256xf32>
    %101 = tpu.matmul %99, %100, %cst_76 {dimension_numbers = #tpu.dot_dimension_numbers<[1], [0], [0], [1], [0, 0, 1, 1], [], []>} : vector<4x8xf32>, vector<8x256xf32>, vector<4x256xf32> -> vector<4x256xf32>
    %102 = arith.addf %97, %101 : vector<4x256xf32>
    %c8 = arith.constant 8 : index
    %c0_77 = arith.constant 0 : index
    %c0_78 = arith.constant 0 : index
    %103 = vector.load %arg6[%c8, %c0_77, %c0_78] : memref<9x4x4xf32, #tpu.memory_space<vmem>>, vector<1x4x4xf32>
    %104 = vector.shape_cast %103 : vector<1x4x4xf32> to vector<4x4xf32>
    %105 = vector.extract_strided_slice %16 {offsets = [0, 34], sizes = [4, 256], strides = [1, 1]} : vector<4x290xf32> to vector<4x256xf32>
    %cst_79 = arith.constant dense<0.000000e+00> : vector<4x256xf32>
    %106 = tpu.matmul %104, %105, %cst_79 {dimension_numbers = #tpu.dot_dimension_numbers<[1], [0], [0], [1], [0, 0, 1, 1], [], []>} : vector<4x4xf32>, vector<4x256xf32>, vector<4x256xf32> -> vector<4x256xf32>
    %107 = arith.addf %102, %106 : vector<4x256xf32>
    %c8_80 = arith.constant 8 : index
    %c0_81 = arith.constant 0 : index
    %c0_82 = arith.constant 0 : index
    %108 = vector.load %arg7[%c8_80, %c0_81, %c0_82] : memref<9x4x8xf32, #tpu.memory_space<vmem>>, vector<1x4x8xf32>
    %109 = vector.shape_cast %108 : vector<1x4x8xf32> to vector<4x8xf32>
    %110 = vector.extract_strided_slice %19 {offsets = [0, 34], sizes = [8, 256], strides = [1, 1]} : vector<8x290xf32> to vector<8x256xf32>
    %cst_83 = arith.constant dense<0.000000e+00> : vector<4x256xf32>
    %111 = tpu.matmul %109, %110, %cst_83 {dimension_numbers = #tpu.dot_dimension_numbers<[1], [0], [0], [1], [0, 0, 1, 1], [], []>} : vector<4x8xf32>, vector<8x256xf32>, vector<4x256xf32> -> vector<4x256xf32>
    %112 = arith.addf %107, %111 : vector<4x256xf32>
    %113 = vector.broadcast %1 : vector<1x256xf32> to vector<4x256xf32>
    %114 = arith.mulf %112, %113 : vector<4x256xf32>
    %115 = arith.addf %83, %114 : vector<4x256xf32>
    %cst_84 = arith.constant 0.000000e+00 : f32
    %116 = vector.broadcast %cst_84 : f32 to vector<4x256xf32>
    %117 = arith.maximumf %115, %116 : vector<4x256xf32>
    %cst_85 = arith.constant 0.000000e+00 : f32
    %118 = vector.broadcast %cst_85 : f32 to vector<4x17xf32>
    %cst_86 = arith.constant 0.000000e+00 : f32
    %119 = vector.broadcast %cst_86 : f32 to vector<4x17xf32>
    %120 = tpu.concatenate %118, %117, %119 in 1 : vector<4x17xf32>, vector<4x256xf32>, vector<4x17xf32> -> vector<4x290xf32>
    %c0_87 = arith.constant 0 : index
    %c0_88 = arith.constant 0 : index
    %121 = vector.load %arg10[%c0_87, %c0_88] : memref<4x1xf32, #tpu.memory_space<vmem>>, vector<4x1xf32>
    %c0_89 = arith.constant 0 : index
    %c0_90 = arith.constant 0 : index
    %c0_91 = arith.constant 0 : index
    %122 = vector.load %arg9[%c0_89, %c0_90, %c0_91] : memref<9x4x4xf32, #tpu.memory_space<vmem>>, vector<1x4x4xf32>
    %123 = vector.shape_cast %122 : vector<1x4x4xf32> to vector<4x4xf32>
    %124 = vector.extract_strided_slice %120 {offsets = [0, 0], sizes = [4, 256], strides = [1, 1]} : vector<4x290xf32> to vector<4x256xf32>
    %cst_92 = arith.constant dense<0.000000e+00> : vector<4x256xf32>
    %125 = tpu.matmul %123, %124, %cst_92 {dimension_numbers = #tpu.dot_dimension_numbers<[1], [0], [0], [1], [0, 0, 1, 1], [], []>} : vector<4x4xf32>, vector<4x256xf32>, vector<4x256xf32> -> vector<4x256xf32>
    %c3_93 = arith.constant 3 : index
    %c0_94 = arith.constant 0 : index
    %c0_95 = arith.constant 0 : index
    %126 = vector.load %arg9[%c3_93, %c0_94, %c0_95] : memref<9x4x4xf32, #tpu.memory_space<vmem>>, vector<1x4x4xf32>
    %127 = vector.shape_cast %126 : vector<1x4x4xf32> to vector<4x4xf32>
    %128 = vector.extract_strided_slice %120 {offsets = [0, 16], sizes = [4, 256], strides = [1, 1]} : vector<4x290xf32> to vector<4x256xf32>
    %cst_96 = arith.constant dense<0.000000e+00> : vector<4x256xf32>
    %129 = tpu.matmul %127, %128, %cst_96 {dimension_numbers = #tpu.dot_dimension_numbers<[1], [0], [0], [1], [0, 0, 1, 1], [], []>} : vector<4x4xf32>, vector<4x256xf32>, vector<4x256xf32> -> vector<4x256xf32>
    %130 = arith.addf %125, %129 : vector<4x256xf32>
    %c6_97 = arith.constant 6 : index
    %c0_98 = arith.constant 0 : index
    %c0_99 = arith.constant 0 : index
    %131 = vector.load %arg9[%c6_97, %c0_98, %c0_99] : memref<9x4x4xf32, #tpu.memory_space<vmem>>, vector<1x4x4xf32>
    %132 = vector.shape_cast %131 : vector<1x4x4xf32> to vector<4x4xf32>
    %133 = vector.extract_strided_slice %120 {offsets = [0, 32], sizes = [4, 256], strides = [1, 1]} : vector<4x290xf32> to vector<4x256xf32>
    %cst_100 = arith.constant dense<0.000000e+00> : vector<4x256xf32>
    %134 = tpu.matmul %132, %133, %cst_100 {dimension_numbers = #tpu.dot_dimension_numbers<[1], [0], [0], [1], [0, 0, 1, 1], [], []>} : vector<4x4xf32>, vector<4x256xf32>, vector<4x256xf32> -> vector<4x256xf32>
    %135 = arith.addf %130, %134 : vector<4x256xf32>
    %136 = vector.broadcast %0 : vector<1x256xf32> to vector<4x256xf32>
    %137 = arith.mulf %135, %136 : vector<4x256xf32>
    %138 = vector.broadcast %121 : vector<4x1xf32> to vector<4x256xf32>
    %139 = arith.addf %138, %137 : vector<4x256xf32>
    %c1_101 = arith.constant 1 : index
    %c0_102 = arith.constant 0 : index
    %c0_103 = arith.constant 0 : index
    %140 = vector.load %arg9[%c1_101, %c0_102, %c0_103] : memref<9x4x4xf32, #tpu.memory_space<vmem>>, vector<1x4x4xf32>
    %141 = vector.shape_cast %140 : vector<1x4x4xf32> to vector<4x4xf32>
    %142 = vector.extract_strided_slice %120 {offsets = [0, 1], sizes = [4, 256], strides = [1, 1]} : vector<4x290xf32> to vector<4x256xf32>
    %cst_104 = arith.constant dense<0.000000e+00> : vector<4x256xf32>
    %143 = tpu.matmul %141, %142, %cst_104 {dimension_numbers = #tpu.dot_dimension_numbers<[1], [0], [0], [1], [0, 0, 1, 1], [], []>} : vector<4x4xf32>, vector<4x256xf32>, vector<4x256xf32> -> vector<4x256xf32>
    %c4_105 = arith.constant 4 : index
    %c0_106 = arith.constant 0 : index
    %c0_107 = arith.constant 0 : index
    %144 = vector.load %arg9[%c4_105, %c0_106, %c0_107] : memref<9x4x4xf32, #tpu.memory_space<vmem>>, vector<1x4x4xf32>
    %145 = vector.shape_cast %144 : vector<1x4x4xf32> to vector<4x4xf32>
    %146 = vector.extract_strided_slice %120 {offsets = [0, 17], sizes = [4, 256], strides = [1, 1]} : vector<4x290xf32> to vector<4x256xf32>
    %cst_108 = arith.constant dense<0.000000e+00> : vector<4x256xf32>
    %147 = tpu.matmul %145, %146, %cst_108 {dimension_numbers = #tpu.dot_dimension_numbers<[1], [0], [0], [1], [0, 0, 1, 1], [], []>} : vector<4x4xf32>, vector<4x256xf32>, vector<4x256xf32> -> vector<4x256xf32>
    %148 = arith.addf %143, %147 : vector<4x256xf32>
    %c7_109 = arith.constant 7 : index
    %c0_110 = arith.constant 0 : index
    %c0_111 = arith.constant 0 : index
    %149 = vector.load %arg9[%c7_109, %c0_110, %c0_111] : memref<9x4x4xf32, #tpu.memory_space<vmem>>, vector<1x4x4xf32>
    %150 = vector.shape_cast %149 : vector<1x4x4xf32> to vector<4x4xf32>
    %151 = vector.extract_strided_slice %120 {offsets = [0, 33], sizes = [4, 256], strides = [1, 1]} : vector<4x290xf32> to vector<4x256xf32>
    %cst_112 = arith.constant dense<0.000000e+00> : vector<4x256xf32>
    %152 = tpu.matmul %150, %151, %cst_112 {dimension_numbers = #tpu.dot_dimension_numbers<[1], [0], [0], [1], [0, 0, 1, 1], [], []>} : vector<4x4xf32>, vector<4x256xf32>, vector<4x256xf32> -> vector<4x256xf32>
    %153 = arith.addf %148, %152 : vector<4x256xf32>
    %154 = arith.addf %139, %153 : vector<4x256xf32>
    %c2_113 = arith.constant 2 : index
    %c0_114 = arith.constant 0 : index
    %c0_115 = arith.constant 0 : index
    %155 = vector.load %arg9[%c2_113, %c0_114, %c0_115] : memref<9x4x4xf32, #tpu.memory_space<vmem>>, vector<1x4x4xf32>
    %156 = vector.shape_cast %155 : vector<1x4x4xf32> to vector<4x4xf32>
    %157 = vector.extract_strided_slice %120 {offsets = [0, 2], sizes = [4, 256], strides = [1, 1]} : vector<4x290xf32> to vector<4x256xf32>
    %cst_116 = arith.constant dense<0.000000e+00> : vector<4x256xf32>
    %158 = tpu.matmul %156, %157, %cst_116 {dimension_numbers = #tpu.dot_dimension_numbers<[1], [0], [0], [1], [0, 0, 1, 1], [], []>} : vector<4x4xf32>, vector<4x256xf32>, vector<4x256xf32> -> vector<4x256xf32>
    %c5_117 = arith.constant 5 : index
    %c0_118 = arith.constant 0 : index
    %c0_119 = arith.constant 0 : index
    %159 = vector.load %arg9[%c5_117, %c0_118, %c0_119] : memref<9x4x4xf32, #tpu.memory_space<vmem>>, vector<1x4x4xf32>
    %160 = vector.shape_cast %159 : vector<1x4x4xf32> to vector<4x4xf32>
    %161 = vector.extract_strided_slice %120 {offsets = [0, 18], sizes = [4, 256], strides = [1, 1]} : vector<4x290xf32> to vector<4x256xf32>
    %cst_120 = arith.constant dense<0.000000e+00> : vector<4x256xf32>
    %162 = tpu.matmul %160, %161, %cst_120 {dimension_numbers = #tpu.dot_dimension_numbers<[1], [0], [0], [1], [0, 0, 1, 1], [], []>} : vector<4x4xf32>, vector<4x256xf32>, vector<4x256xf32> -> vector<4x256xf32>
    %163 = arith.addf %158, %162 : vector<4x256xf32>
    %c8_121 = arith.constant 8 : index
    %c0_122 = arith.constant 0 : index
    %c0_123 = arith.constant 0 : index
    %164 = vector.load %arg9[%c8_121, %c0_122, %c0_123] : memref<9x4x4xf32, #tpu.memory_space<vmem>>, vector<1x4x4xf32>
    %165 = vector.shape_cast %164 : vector<1x4x4xf32> to vector<4x4xf32>
    %166 = vector.extract_strided_slice %120 {offsets = [0, 34], sizes = [4, 256], strides = [1, 1]} : vector<4x290xf32> to vector<4x256xf32>
    %cst_124 = arith.constant dense<0.000000e+00> : vector<4x256xf32>
    %167 = tpu.matmul %165, %166, %cst_124 {dimension_numbers = #tpu.dot_dimension_numbers<[1], [0], [0], [1], [0, 0, 1, 1], [], []>} : vector<4x4xf32>, vector<4x256xf32>, vector<4x256xf32> -> vector<4x256xf32>
    %168 = arith.addf %163, %167 : vector<4x256xf32>
    %169 = vector.broadcast %1 : vector<1x256xf32> to vector<4x256xf32>
    %170 = arith.mulf %168, %169 : vector<4x256xf32>
    %171 = arith.addf %154, %170 : vector<4x256xf32>
    %cst_125 = arith.constant 0.000000e+00 : f32
    %172 = vector.broadcast %cst_125 : f32 to vector<4x256xf32>
    %173 = arith.maximumf %171, %172 : vector<4x256xf32>
    %c0_126 = arith.constant 0 : index
    %c0_127 = arith.constant 0 : index
    %c0_128 = arith.constant 0 : index
    %174 = vector.load %arg11[%c0_126, %c0_127, %c0_128] : memref<1x4x256xf32, #tpu.memory_space<vmem>>, vector<1x4x256xf32>
    %175 = vector.shape_cast %174 : vector<1x4x256xf32> to vector<4x256xf32>
    %176 = vector.shape_cast %173 : vector<4x256xf32> to vector<1x4x256xf32>
    tpu.vector_store %arg11[%c0_126, %c0_127, %c0_128], %176 {strides = array<i32>} : memref<1x4x256xf32, #tpu.memory_space<vmem>>, vector<1x4x256xf32>,
    return
  }
  func.func @transform_0(%arg0: i32) -> (i32, i32, i32) {
    %c0_i32 = arith.constant 0 : i32
    %c0_i32_0 = arith.constant 0 : i32
    %c0_i32_1 = arith.constant 0 : i32
    return %arg0, %c0_i32, %c0_i32_0 : i32, i32, i32
  }
  func.func @transform_1(%arg0: i32) -> (i32, i32, i32) {
    %c0_i32 = arith.constant 0 : i32
    %c0_i32_0 = arith.constant 0 : i32
    %c0_i32_1 = arith.constant 0 : i32
    return %arg0, %c0_i32, %c0_i32_0 : i32, i32, i32
  }
  func.func @transform_2(%arg0: i32) -> (i32, i32) {
    %c0_i32 = arith.constant 0 : i32
    %c0_i32_0 = arith.constant 0 : i32
    %c0_i32_1 = arith.constant 0 : i32
    return %c0_i32, %c0_i32_0 : i32, i32
  }
  func.func @transform_3(%arg0: i32) -> (i32, i32) {
    %c0_i32 = arith.constant 0 : i32
    %c0_i32_0 = arith.constant 0 : i32
    %c0_i32_1 = arith.constant 0 : i32
    return %c0_i32, %c0_i32_0 : i32, i32
  }
  func.func @transform_4(%arg0: i32) -> (i32, i32) {
    %c0_i32 = arith.constant 0 : i32
    %c0_i32_0 = arith.constant 0 : i32
    %c0_i32_1 = arith.constant 0 : i32
    return %c0_i32, %c0_i32_0 : i32, i32
  }
  func.func @transform_5(%arg0: i32) -> (i32, i32, i32) {
    %c0_i32 = arith.constant 0 : i32
    %c0_i32_0 = arith.constant 0 : i32
    %c0_i32_1 = arith.constant 0 : i32
    %c0_i32_2 = arith.constant 0 : i32
    return %c0_i32, %c0_i32_0, %c0_i32_1 : i32, i32, i32
  }
  func.func @transform_6(%arg0: i32) -> (i32, i32, i32) {
    %c0_i32 = arith.constant 0 : i32
    %c0_i32_0 = arith.constant 0 : i32
    %c0_i32_1 = arith.constant 0 : i32
    %c0_i32_2 = arith.constant 0 : i32
    return %c0_i32, %c0_i32_0, %c0_i32_1 : i32, i32, i32
  }
  func.func @transform_7(%arg0: i32) -> (i32, i32) {
    %c0_i32 = arith.constant 0 : i32
    %c0_i32_0 = arith.constant 0 : i32
    %c0_i32_1 = arith.constant 0 : i32
    return %c0_i32, %c0_i32_0 : i32, i32
  }
  func.func @transform_8(%arg0: i32) -> (i32, i32, i32) {
    %c0_i32 = arith.constant 0 : i32
    %c0_i32_0 = arith.constant 0 : i32
    %c0_i32_1 = arith.constant 0 : i32
    %c0_i32_2 = arith.constant 0 : i32
    return %c0_i32, %c0_i32_0, %c0_i32_1 : i32, i32, i32
  }
  func.func @transform_9(%arg0: i32) -> (i32, i32) {
    %c0_i32 = arith.constant 0 : i32
    %c0_i32_0 = arith.constant 0 : i32
    %c0_i32_1 = arith.constant 0 : i32
    return %c0_i32, %c0_i32_0 : i32, i32
  }
  func.func @transform_10(%arg0: i32) -> (i32, i32, i32) {
    %c0_i32 = arith.constant 0 : i32
    %c0_i32_0 = arith.constant 0 : i32
    %c0_i32_1 = arith.constant 0 : i32
    return %arg0, %c0_i32, %c0_i32_0 : i32, i32, i32
  }
}

</mosaic_0001>

<llo_original>
// kernel: up_forward.1
$region0: #{up_forward.1}
  #allocation0 [shape = 'u32[]', space=smem, size = 0x4, offset = 0x4, fixed_abs, tag = 'smem constant byte address 0x4 - core index']
  #allocation1 [shape = 'u32[72,128]{1,0:T(1,128)}', space=vmem, size = 0x9000, scoped, tag = 'internal scratch']
  %s0 = inlined_call_operand.vmem [shape: f32[2,64,8], index: 0, kind: input, shape index: {}]
  %s1 = inlined_call_operand.vmem [shape: f32[2,4,256], index: 1, kind: input, shape index: {}]
  %s2 = inlined_call_operand.vmem [shape: f32[2,256], index: 2, kind: input, shape index: {}]
  %s3 = inlined_call_operand.vmem [shape: f32[8,16], index: 3, kind: input, shape index: {}]
  %s4 = inlined_call_operand.vmem [shape: f32[16,8], index: 4, kind: input, shape index: {}]
  %s5 = inlined_call_operand.vmem [shape: f32[9,4,4], index: 5, kind: input, shape index: {}]
  %s6 = inlined_call_operand.vmem [shape: f32[9,4,8], index: 6, kind: input, shape index: {}]
  %s7 = inlined_call_operand.vmem [shape: f32[4,1], index: 7, kind: input, shape index: {}]
  %s8 = inlined_call_operand.vmem [shape: f32[9,4,4], index: 8, kind: input, shape index: {}]
  %s9 = inlined_call_operand.vmem [shape: f32[4,1], index: 9, kind: input, shape index: {}]
  %s10 = inlined_call_operand.vmem [shape: f32[2,4,256], index: 10, kind: output, shape index: {}]
  %s11 = sld [smem:[#allocation0]]
  $region73: #{up_forward.1} parent=0
    _
  %s13 = ssub.s32 1, %s11
  %s14 = scalar_select 0, %s13, %s11
  loop: start=0, step=1, limit=4
  $region2: #{up_forward.1} parent=0 // loop_pre_header
    _
  $region3: #{up_forward.1} parent=0 // loop_header
    %s16 = sphi 0, %s20
    %p17 = scmp.ge.s32.totalorder %s16, 4
    %s26 = sphi 0, %s28
    %s29 = sphi 0, %s26
    %s30 = sphi 0, %s29
    %s46 = sphi 0, %s30
    %s52 = sphi 0, %s54
    %s55 = sphi 0, %s52
    %s56 = sphi 0, %s55
    %s72 = sphi 0, %s56
    %s76 = sphi 0, %s76
    %s78 = sphi 0, %s76
    %s79 = sphi 0, %s78
    %s93 = sphi 0, %s79
    %s97 = sphi 0, %s97
    %s99 = sphi 0, %s97
    %s100 = sphi 0, %s99
    %s114 = sphi 0, %s100
    %s118 = sphi 0, %s118
    %s120 = sphi 0, %s118
    %s121 = sphi 0, %s120
    %s135 = sphi 0, %s121
    %s139 = sphi 0, %s139
    %s141 = sphi 0, %s139
    %s142 = sphi 0, %s141
    %s156 = sphi 0, %s142
    %s160 = sphi 0, %s160
    %s162 = sphi 0, %s160
    %s163 = sphi 0, %s162
    %s177 = sphi 0, %s163
    %s181 = sphi 0, %s181
    %s183 = sphi 0, %s181
    %s184 = sphi 0, %s183
    %s198 = sphi 0, %s184
    %s202 = sphi 0, %s202
    %s204 = sphi 0, %s202
    %s205 = sphi 0, %s204
    %s219 = sphi 0, %s205
    %s223 = sphi 0, %s223
    %s225 = sphi 0, %s223
    %s226 = sphi 0, %s225
    %s240 = sphi 0, %s226
    %s246 = sphi 0, %s248
    %s249 = sphi 0, %s246
    %s250 = sphi 0, %s249
    %s266 = sphi 0, %s250
  $region4: #{up_forward.1} parent=0 // loop_header_branch
    %19 = sbr.rel (%p17) target = $region8
  $region5: #{up_forward.1} parent=0 // loop_body
    %s21 = ssub.s32 %s16, 1
    %s22 = ssub.s32 %s16, 2
    %s23 = sadd.s32 %s16, 1
    %s24 = ssub.s32 %s16, %s23
    %p25 = scmp.eq.s32.totalorder %s24, 0
    %s27 = sadd.s32 %s26, 1
    %s28 = scalar_select %p25, %s26, %s27
    %p31 = pneg %p25
    %p32 = scmp.eq.s32.totalorder %s16, 1
    %p33 = por %p31, %p32
    %p34 = scmp.ne.s32.totalorder %s26, %s29
    %p35 = scmp.eq.s32.totalorder %s16, 0
    %p36 = por %p34, %p35
    %p37 = scmp.ne.s32.totalorder %s26, %s29
    %p38 = scmp.eq.s32.totalorder %s21, 1
    %p39 = por %p37, %p38
    %p40 = scmp.ne.s32.totalorder %s29, %s30
    %p41 = scmp.eq.s32.totalorder %s21, 0
    %p42 = por %p40, %p41
    %p43 = scmp.ne.s32.totalorder %s29, %s30
    %p44 = scmp.eq.s32.totalorder %s22, 1
    %p45 = por %p43, %p44
    %p47 = scmp.ne.s32.totalorder %s30, %s46
    %p48 = scmp.eq.s32.totalorder %s22, 0
    %p49 = por %p47, %p48
    %s50 = ssub.s32 %s16, %s23
    %p51 = scmp.eq.s32.totalorder %s50, 0
    %s53 = sadd.s32 %s52, 1
    %s54 = scalar_select %p51, %s52, %s53
    %p57 = pneg %p51
    %p58 = scmp.eq.s32.totalorder %s16, 1
    %p59 = por %p57, %p58
    %p60 = scmp.ne.s32.totalorder %s52, %s55
    %p61 = scmp.eq.s32.totalorder %s16, 0
    %p62 = por %p60, %p61
    %p63 = scmp.ne.s32.totalorder %s52, %s55
    %p64 = scmp.eq.s32.totalorder %s21, 1
    %p65 = por %p63, %p64
    %p66 = scmp.ne.s32.totalorder %s55, %s56
    %p67 = scmp.eq.s32.totalorder %s21, 0
    %p68 = por %p66, %p67
    %p69 = scmp.ne.s32.totalorder %s55, %s56
    %p70 = scmp.eq.s32.totalorder %s22, 1
    %p71 = por %p69, %p70
    %p73 = scmp.ne.s32.totalorder %s56, %s72
    %p74 = scmp.eq.s32.totalorder %s22, 0
    %p75 = por %p73, %p74
    %s77 = sadd.s32 %s76, 1
    %p80 = scmp.eq.s32.totalorder %s16, 1
    %p81 = scmp.ne.s32.totalorder %s76, %s78
    %p82 = scmp.eq.s32.totalorder %s16, 0
    %p83 = por %p81, %p82
    %p84 = scmp.ne.s32.totalorder %s76, %s78
    %p85 = scmp.eq.s32.totalorder %s21, 1
    %p86 = por %p84, %p85
    %p87 = scmp.ne.s32.totalorder %s78, %s79
    %p88 = scmp.eq.s32.totalorder %s21, 0
    %p89 = por %p87, %p88
    %p90 = scmp.ne.s32.totalorder %s78, %s79
    %p91 = scmp.eq.s32.totalorder %s22, 1
    %p92 = por %p90, %p91
    %p94 = scmp.ne.s32.totalorder %s79, %s93
    %p95 = scmp.eq.s32.totalorder %s22, 0
    %p96 = por %p94, %p95
    %s98 = sadd.s32 %s97, 1
    %p101 = scmp.eq.s32.totalorder %s16, 1
    %p102 = scmp.ne.s32.totalorder %s97, %s99
    %p103 = scmp.eq.s32.totalorder %s16, 0
    %p104 = por %p102, %p103
    %p105 = scmp.ne.s32.totalorder %s97, %s99
    %p106 = scmp.eq.s32.totalorder %s21, 1
    %p107 = por %p105, %p106
    %p108 = scmp.ne.s32.totalorder %s99, %s100
    %p109 = scmp.eq.s32.totalorder %s21, 0
    %p110 = por %p108, %p109
    %p111 = scmp.ne.s32.totalorder %s99, %s100
    %p112 = scmp.eq.s32.totalorder %s22, 1
    %p113 = por %p111, %p112
    %p115 = scmp.ne.s32.totalorder %s100, %s114
    %p116 = scmp.eq.s32.totalorder %s22, 0
    %p117 = por %p115, %p116
    %s119 = sadd.s32 %s118, 1
    %p122 = scmp.eq.s32.totalorder %s16, 1
    %p123 = scmp.ne.s32.totalorder %s118, %s120
    %p124 = scmp.eq.s32.totalorder %s16, 0
    %p125 = por %p123, %p124
    %p126 = scmp.ne.s32.totalorder %s118, %s120
    %p127 = scmp.eq.s32.totalorder %s21, 1
    %p128 = por %p126, %p127
    %p129 = scmp.ne.s32.totalorder %s120, %s121
    %p130 = scmp.eq.s32.totalorder %s21, 0
    %p131 = por %p129, %p130
    %p132 = scmp.ne.s32.totalorder %s120, %s121
    %p133 = scmp.eq.s32.totalorder %s22, 1
    %p134 = por %p132, %p133
    %p136 = scmp.ne.s32.totalorder %s121, %s135
    %p137 = scmp.eq.s32.totalorder %s22, 0
    %p138 = por %p136, %p137
    %s140 = sadd.s32 %s139, 1
    %p143 = scmp.eq.s32.totalorder %s16, 1
    %p144 = scmp.ne.s32.totalorder %s139, %s141
    %p145 = scmp.eq.s32.totalorder %s16, 0
    %p146 = por %p144, %p145
    %p147 = scmp.ne.s32.totalorder %s139, %s141
    %p148 = scmp.eq.s32.totalorder %s21, 1
    %p149 = por %p147, %p148
    %p150 = scmp.ne.s32.totalorder %s141, %s142
    %p151 = scmp.eq.s32.totalorder %s21, 0
    %p152 = por %p150, %p151
    %p153 = scmp.ne.s32.totalorder %s141, %s142
    %p154 = scmp.eq.s32.totalorder %s22, 1
    %p155 = por %p153, %p154
    %p157 = scmp.ne.s32.totalorder %s142, %s156
    %p158 = scmp.eq.s32.totalorder %s22, 0
    %p159 = por %p157, %p158
    %s161 = sadd.s32 %s160, 1
    %p164 = scmp.eq.s32.totalorder %s16, 1
    %p165 = scmp.ne.s32.totalorder %s160, %s162
    %p166 = scmp.eq.s32.totalorder %s16, 0
    %p167 = por %p165, %p166
    %p168 = scmp.ne.s32.totalorder %s160, %s162
    %p169 = scmp.eq.s32.totalorder %s21, 1
    %p170 = por %p168, %p169
    %p171 = scmp.ne.s32.totalorder %s162, %s163
    %p172 = scmp.eq.s32.totalorder %s21, 0
    %p173 = por %p171, %p172
    %p174 = scmp.ne.s32.totalorder %s162, %s163
    %p175 = scmp.eq.s32.totalorder %s22, 1
    %p176 = por %p174, %p175
    %p178 = scmp.ne.s32.totalorder %s163, %s177
    %p179 = scmp.eq.s32.totalorder %s22, 0
    %p180 = por %p178, %p179
    %s182 = sadd.s32 %s181, 1
    %p185 = scmp.eq.s32.totalorder %s16, 1
    %p186 = scmp.ne.s32.totalorder %s181, %s183
    %p187 = scmp.eq.s32.totalorder %s16, 0
    %p188 = por %p186, %p187
    %p189 = scmp.ne.s32.totalorder %s181, %s183
    %p190 = scmp.eq.s32.totalorder %s21, 1
    %p191 = por %p189, %p190
    %p192 = scmp.ne.s32.totalorder %s183, %s184
    %p193 = scmp.eq.s32.totalorder %s21, 0
    %p194 = por %p192, %p193
    %p195 = scmp.ne.s32.totalorder %s183, %s184
    %p196 = scmp.eq.s32.totalorder %s22, 1
    %p197 = por %p195, %p196
    %p199 = scmp.ne.s32.totalorder %s184, %s198
    %p200 = scmp.eq.s32.totalorder %s22, 0
    %p201 = por %p199, %p200
    %s203 = sadd.s32 %s202, 1
    %p206 = scmp.eq.s32.totalorder %s16, 1
    %p207 = scmp.ne.s32.totalorder %s202, %s204
    %p208 = scmp.eq.s32.totalorder %s16, 0
    %p209 = por %p207, %p208
    %p210 = scmp.ne.s32.totalorder %s202, %s204
    %p211 = scmp.eq.s32.totalorder %s21, 1
    %p212 = por %p210, %p211
    %p213 = scmp.ne.s32.totalorder %s204, %s205
    %p214 = scmp.eq.s32.totalorder %s21, 0
    %p215 = por %p213, %p214
    %p216 = scmp.ne.s32.totalorder %s204, %s205
    %p217 = scmp.eq.s32.totalorder %s22, 1
    %p218 = por %p216, %p217
    %p220 = scmp.ne.s32.totalorder %s205, %s219
    %p221 = scmp.eq.s32.totalorder %s22, 0
    %p222 = por %p220, %p221
    %s224 = sadd.s32 %s223, 1
    %p227 = scmp.eq.s32.totalorder %s16, 1
    %p228 = scmp.ne.s32.totalorder %s223, %s225
    %p229 = scmp.eq.s32.totalorder %s16, 0
    %p230 = por %p228, %p229
    %p231 = scmp.ne.s32.totalorder %s223, %s225
    %p232 = scmp.eq.s32.totalorder %s21, 1
    %p233 = por %p231, %p232
    %p234 = scmp.ne.s32.totalorder %s225, %s226
    %p235 = scmp.eq.s32.totalorder %s21, 0
    %p236 = por %p234, %p235
    %p237 = scmp.ne.s32.totalorder %s225, %s226
    %p238 = scmp.eq.s32.totalorder %s22, 1
    %p239 = por %p237, %p238
    %p241 = scmp.ne.s32.totalorder %s226, %s240
    %p242 = scmp.eq.s32.totalorder %s22, 0
    %p243 = por %p241, %p242
    %s244 = ssub.s32 %s16, %s23
    %p245 = scmp.eq.s32.totalorder %s244, 0
    %s247 = sadd.s32 %s246, 1
    %s248 = scalar_select %p245, %s246, %s247
    %p251 = pneg %p245
    %p252 = scmp.eq.s32.totalorder %s16, 1
    %p253 = por %p251, %p252
    %p254 = scmp.ne.s32.totalorder %s246, %s249
    %p255 = scmp.eq.s32.totalorder %s16, 0
    %p256 = por %p254, %p255
    %p257 = scmp.ne.s32.totalorder %s246, %s249
    %p258 = scmp.eq.s32.totalorder %s21, 1
    %p259 = por %p257, %p258
    %p260 = scmp.ne.s32.totalorder %s249, %s250
    %p261 = scmp.eq.s32.totalorder %s21, 0
    %p262 = por %p260, %p261
    %p263 = scmp.ne.s32.totalorder %s249, %s250
    %p264 = scmp.eq.s32.totalorder %s22, 1
    %p265 = por %p263, %p264
    %p267 = scmp.ne.s32.totalorder %s250, %s266
    %p268 = scmp.eq.s32.totalorder %s22, 0
    %p269 = por %p267, %p268
    %p270 = scmp.le.s32.totalorder 1, %s16
    %p271 = scmp.lt.s32.totalorder %s16, 3
    %p272 = pnand %p270, %p271
    %p273 = pneg %p272
    // Predicated region
    $region9: #{up_forward.1} parent=5 // pred_check
      _
    $region10: #{up_forward.1} parent=5 // pred_check_branch
      %275 = sbr.rel (%p272) target = $region12
    $region11: #{up_forward.1} parent=5 // pred_region
      %s276 = ssub.s32 %s16, 1
      // Predicated region
      $region13: #{up_forward.1} parent=11 // pred_check
        %p277 = pneg %p89
      $region14: #{up_forward.1} parent=11 // pred_check_branch
        %279 = sbr.rel (%p277) target = $region16
      $region15: #{up_forward.1} parent=11 // pred_region
        _
      $region16: #{up_forward.1} parent=11 // pred_fallthru
        _
      // Predicated region
      $region17: #{up_forward.1} parent=11 // pred_check
        %p280 = pneg %p110
      $region18: #{up_forward.1} parent=11 // pred_check_branch
        %282 = sbr.rel (%p280) target = $region20
      $region19: #{up_forward.1} parent=11 // pred_region
        _
      $region20: #{up_forward.1} parent=11 // pred_fallthru
        _
      // Predicated region
      $region21: #{up_forward.1} parent=11 // pred_check
        %p283 = pneg %p131
      $region22: #{up_forward.1} parent=11 // pred_check_branch
        %285 = sbr.rel (%p283) target = $region24
      $region23: #{up_forward.1} parent=11 // pred_region
        _
      $region24: #{up_forward.1} parent=11 // pred_fallthru
        _
      // Predicated region
      $region25: #{up_forward.1} parent=11 // pred_check
        %p286 = pneg %p152
      $region26: #{up_forward.1} parent=11 // pred_check_branch
        %288 = sbr.rel (%p286) target = $region28
      $region27: #{up_forward.1} parent=11 // pred_region
        _
      $region28: #{up_forward.1} parent=11 // pred_fallthru
        _
      // Predicated region
      $region29: #{up_forward.1} parent=11 // pred_check
        %p289 = pneg %p173
      $region30: #{up_forward.1} parent=11 // pred_check_branch
        %291 = sbr.rel (%p289) target = $region32
      $region31: #{up_forward.1} parent=11 // pred_region
        _
      $region32: #{up_forward.1} parent=11 // pred_fallthru
        _
      // Predicated region
      $region33: #{up_forward.1} parent=11 // pred_check
        %p292 = pneg %p194
      $region34: #{up_forward.1} parent=11 // pred_check_branch
        %294 = sbr.rel (%p292) target = $region36
      $region35: #{up_forward.1} parent=11 // pred_region
        _
      $region36: #{up_forward.1} parent=11 // pred_fallthru
        _
      // Predicated region
      $region37: #{up_forward.1} parent=11 // pred_check
        %p295 = pneg %p215
      $region38: #{up_forward.1} parent=11 // pred_check_branch
        %297 = sbr.rel (%p295) target = $region40
      $region39: #{up_forward.1} parent=11 // pred_region
        _
      $region40: #{up_forward.1} parent=11 // pred_fallthru
        _
      // Predicated region
      $region41: #{up_forward.1} parent=11 // pred_check
        %p298 = pneg %p236
      $region42: #{up_forward.1} parent=11 // pred_check_branch
        %300 = sbr.rel (%p298) target = $region44
      $region43: #{up_forward.1} parent=11 // pred_region
        _
      $region44: #{up_forward.1} parent=11 // pred_fallthru
        _
    $region12: #{up_forward.1} parent=5 // pred_fallthru
      _
    %p301 = scmp.lt.s32.totalorder %s16, 2
    // Predicated region
    $region45: #{up_forward.1} parent=5 // pred_check
      %p302 = pneg %p301
    $region46: #{up_forward.1} parent=5 // pred_check_branch
      %304 = sbr.rel (%p302) target = $region48
    $region47: #{up_forward.1} parent=5 // pred_region
      // Predicated region
      $region49: #{up_forward.1} parent=47 // pred_check
        %p305 = pneg %p36
      $region50: #{up_forward.1} parent=47 // pred_check_branch
        %307 = sbr.rel (%p305) target = $region52
      $region51: #{up_forward.1} parent=47 // pred_region
        %p308 = scmp.lt.s32.totalorder %s16, 1
        %s309 = scalar_select %p308, %s16, 1
        %s310 = smul.addr %s309, 8
        %s311 = smul.addr %s310, 8
        %s312 = scalar_lea.vmem %s0, %s311
      $region52: #{up_forward.1} parent=47 // pred_fallthru
        _
      // Predicated region
      $region53: #{up_forward.1} parent=47 // pred_check
        %p313 = pneg %p62
      $region54: #{up_forward.1} parent=47 // pred_check_branch
        %315 = sbr.rel (%p313) target = $region56
      $region55: #{up_forward.1} parent=47 // pred_region
        %p316 = scmp.lt.s32.totalorder %s16, 1
        %s317 = scalar_select %p316, %s16, 1
        %s318 = smul.addr %s317, 2
        %s319 = smul.addr %s318, 4
        %s320 = scalar_lea.vmem %s1, %s319
      $region56: #{up_forward.1} parent=47 // pred_fallthru
        _
    $region48: #{up_forward.1} parent=5 // pred_fallthru
      _
    %p321 = scmp.le.s32.totalorder 1, %s16
    %p322 = scmp.lt.s32.totalorder %s16, 3
    %p323 = pnand %p321, %p322
    %p324 = pneg %p323
    // Predicated region
    $region57: #{up_forward.1} parent=5 // pred_check
      _
    $region58: #{up_forward.1} parent=5 // pred_check_branch
      %326 = sbr.rel (%p323) target = $region60
    $region59: #{up_forward.1} parent=5 // pred_region
      %s327 = ssub.s32 %s16, 1
      %p328 = scmp.lt.s32.totalorder %s21, 1
      %s329 = scalar_select %p328, %s21, 1
      %s330 = smul.addr %s329, 8
      %s331 = smul.addr %s330, 8
      %s332 = scalar_lea.vmem %s0, %s331
      %p333 = pneg %p42
      %p334 = pneg %p39
      %p335 = scmp.lt.s32.totalorder %s21, 1
      %s336 = scalar_select %p335, %s21, 1
      %s337 = smul.addr %s336, 2
      %s338 = smul.addr %s337, 4
      %s339 = scalar_lea.vmem %s1, %s338
      %p340 = pneg %p68
      %p341 = pneg %p65
      %p342 = pneg %p89
      %p343 = pneg %p86
      %p344 = pneg %p110
      %p345 = pneg %p107
      %p346 = pneg %p131
      %p347 = pneg %p128
      %p348 = pneg %p152
      %p349 = pneg %p149
      %p350 = pneg %p173
      %p351 = pneg %p170
      %p352 = pneg %p194
      %p353 = pneg %p191
      %p354 = pneg %p215
      %p355 = pneg %p212
      %p356 = pneg %p236
      %p357 = pneg %p233
      %p358 = pneg %p262
      %p359 = pneg %p259
      %p360 = scmp.lt.s32.totalorder %s21, 1
      %s361 = scalar_select %p360, %s21, 1
      %s362 = smul.addr %s361, 2
      %s363 = smul.addr %s362, 4
      %s364 = scalar_lea.vmem %s10, %s363
      %p365 = scmp.lt.s32.totalorder %s21, 1
      %s366 = scalar_select %p365, %s21, 1
      %s367 = smul.addr %s366, 8
      %s368 = smul.addr %s367, 8
      %s369 = scalar_lea.vmem %s0, %s368
      %p370 = scmp.lt.s32.totalorder %s21, 1
      %s371 = scalar_select %p370, %s21, 1
      %s372 = smul.addr %s371, 2
      %s373 = smul.addr %s372, 4
      %s374 = scalar_lea.vmem %s1, %s373
      %p375 = scmp.lt.s32.totalorder %s21, 1
      %s376 = scalar_select %p375, %s21, 1
      %s377 = smul.addr %s376, 2
      %s378 = smul.addr %s377, 4
      %s379 = scalar_lea.vmem %s10, %s378
      %v380 = vld [vmem:[%s2] ss:$2 sm:$0x3]
      %s381 = scalar_lea.vmem %s2, 1
      %v382 = vld [vmem:[%s381] ss:$2 sm:$0x3]
      %v383 = vld [vmem:[%s369] sm:$0xff]
      %v384 = vld [vmem:[%s369 + $0x8] sm:$0xff]
      %v385 = vld [vmem:[%s369 + $0x10] sm:$0xff]
      %v386 = vld [vmem:[%s369 + $0x18] sm:$0xff]
      %v387 = vld [vmem:[%s369 + $0x20] sm:$0xff]
      %v388 = vld [vmem:[%s369 + $0x28] sm:$0xff]
      %v389 = vld [vmem:[%s369 + $0x30] sm:$0xff]
      %v390 = vld [vmem:[%s369 + $0x38] sm:$0xff]
      %v391 = vld [vmem:[%s3] sm:$0xff]
      %vm392 = vcmask 64512
      %v394 = vsel %vm392, %v383, 0
      %v397 = vsel %vm392, %v384, 0
      %v400 = vsel %vm392, %v385, 0
      %v403 = vsel %vm392, %v386, 0
      %v406 = vsel %vm392, %v387, 0
      %v409 = vsel %vm392, %v388, 0
      %v412 = vsel %vm392, %v389, 0
      %v415 = vsel %vm392, %v390, 0
      %417 = vmatpush.msra.mxu0 0.0
      %418 = vmatpush.msra.mxu0 0.0
      %419 = vmatpush.msra.mxu0 0.0
      %420 = vmatpush.msra.mxu0 0.0
      %421 = vmatpush.msra.mxu0 0.0
      %422 = vmatpush.msra.mxu0 0.0
      %423 = vmatpush.msra.mxu0 0.0
      %424 = vmatpush.msra.mxu0 0.0
      %425 = vmatpush.msra.mxu0 0.0
      %426 = vmatpush.msra.mxu0 0.0
      %427 = vmatpush.msra.mxu0 0.0
      %428 = vmatpush.msra.mxu0 0.0
      %429 = vmatpush.msra.mxu0 0.0
      %430 = vmatpush.msra.mxu0 0.0
      %431 = vmatpush.msra.mxu0 0.0
      %432 = vmatpush.msra.mxu0 %v391
      %433 = vmatmul.f32.gmra.mxu0 %v394
      %v434 = vpop.f32.mrf.mxu0
      %v435 = vadd.f32 0.0, %v434
      %436 = vmatmul.f32.gmra.mxu0 %v397
      %v437 = vpop.f32.mrf.mxu0
      %v438 = vadd.f32 0.0, %v437
      %439 = vmatmul.f32.gmra.mxu0 %v400
      %v440 = vpop.f32.mrf.mxu0
      %v441 = vadd.f32 0.0, %v440
      %442 = vmatmul.f32.gmra.mxu0 %v403
      %v443 = vpop.f32.mrf.mxu0
      %v444 = vadd.f32 0.0, %v443
      %445 = vmatmul.f32.gmra.mxu0 %v406
      %v446 = vpop.f32.mrf.mxu0
      %v447 = vadd.f32 0.0, %v446
      %448 = vmatmul.f32.gmra.mxu0 %v409
      %v449 = vpop.f32.mrf.mxu0
      %v450 = vadd.f32 0.0, %v449
      %451 = vmatmul.f32.gmra.mxu0 %v412
      %v452 = vpop.f32.mrf.mxu0
      %v453 = vadd.f32 0.0, %v452
      %454 = vmatmul.f32.gmra.mxu0 %v415
      %v455 = vpop.f32.mrf.mxu0
      %v456 = vadd.f32 0.0, %v455
      %457 = vdwg.mxu0
      %v458 = vld [vmem:[%s4] sm:$0xff]
      %v459 = vld [vmem:[%s4 + $0x8] sm:$0xff]
      %v461 = vsel %vm392, %v458, 0
      %v464 = vsel %vm392, %v459, 0
      %466 = vmatpush.msra.mxu0 0.0
      %467 = vmatpush.msra.mxu0 0.0
      %468 = vmatpush.msra.mxu0 0.0
      %469 = vmatpush.msra.mxu0 0.0
      %470 = vmatpush.msra.mxu0 0.0
      %471 = vmatpush.msra.mxu0 0.0
      %472 = vmatpush.msra.mxu0 0.0
      %473 = vmatpush.msra.mxu0 0.0
      %474 = vmatpush.msra.mxu0 0.0
      %475 = vmatpush.msra.mxu0 0.0
      %476 = vmatpush.msra.mxu0 0.0
      %477 = vmatpush.msra.mxu0 0.0
      %478 = vmatpush.msra.mxu0 0.0
      %479 = vmatpush.msra.mxu0 0.0
      %480 = vmatpush.msra.mxu0 0.0
      %481 = vmatpush.msra.mxu0 %v435
      %482 = vmatmul.f32.gmra.mxu0 %v461
      %v483 = vpop.f32.mrf.mxu0
      %v484 = vadd.f32 0.0, %v483
      %485 = vmatmul.f32.gmra.mxu0 %v464
      %v486 = vpop.f32.mrf.mxu0
      %v487 = vadd.f32 0.0, %v486
      %488 = vdwg.mxu0
      %489 = vmatpush.msra.mxu0 0.0
      %490 = vmatpush.msra.mxu0 0.0
      %491 = vmatpush.msra.mxu0 0.0
      %492 = vmatpush.msra.mxu0 0.0
      %493 = vmatpush.msra.mxu0 0.0
      %494 = vmatpush.msra.mxu0 0.0
      %495 = vmatpush.msra.mxu0 0.0
      %496 = vmatpush.msra.mxu0 0.0
      %497 = vmatpush.msra.mxu0 0.0
      %498 = vmatpush.msra.mxu0 0.0
      %499 = vmatpush.msra.mxu0 0.0
      %500 = vmatpush.msra.mxu0 0.0
      %501 = vmatpush.msra.mxu0 0.0
      %502 = vmatpush.msra.mxu0 0.0
      %503 = vmatpush.msra.mxu0 0.0
      %504 = vmatpush.msra.mxu0 %v438
      %505 = vmatmul.f32.gmra.mxu0 %v461
      %v506 = vpop.f32.mrf.mxu0
      %v507 = vadd.f32 0.0, %v506
      %508 = vmatmul.f32.gmra.mxu0 %v464
      %v509 = vpop.f32.mrf.mxu0
      %v510 = vadd.f32 0.0, %v509
      %511 = vdwg.mxu0
      %512 = vmatpush.msra.mxu0 0.0
      %513 = vmatpush.msra.mxu0 0.0
      %514 = vmatpush.msra.mxu0 0.0
      %515 = vmatpush.msra.mxu0 0.0
      %516 = vmatpush.msra.mxu0 0.0
      %517 = vmatpush.msra.mxu0 0.0
      %518 = vmatpush.msra.mxu0 0.0
      %519 = vmatpush.msra.mxu0 0.0
      %520 = vmatpush.msra.mxu0 0.0
      %521 = vmatpush.msra.mxu0 0.0
      %522 = vmatpush.msra.mxu0 0.0
      %523 = vmatpush.msra.mxu0 0.0
      %524 = vmatpush.msra.mxu0 0.0
      %525 = vmatpush.msra.mxu0 0.0
      %526 = vmatpush.msra.mxu0 0.0
      %527 = vmatpush.msra.mxu0 %v441
      %528 = vmatmul.f32.gmra.mxu0 %v461
      %v529 = vpop.f32.mrf.mxu0
      %v530 = vadd.f32 0.0, %v529
      %531 = vmatmul.f32.gmra.mxu0 %v464
      %v532 = vpop.f32.mrf.mxu0
      %v533 = vadd.f32 0.0, %v532
      %534 = vdwg.mxu0
      %535 = vmatpush.msra.mxu0 0.0
      %536 = vmatpush.msra.mxu0 0.0
      %537 = vmatpush.msra.mxu0 0.0
      %538 = vmatpush.msra.mxu0 0.0
      %539 = vmatpush.msra.mxu0 0.0
      %540 = vmatpush.msra.mxu0 0.0
      %541 = vmatpush.msra.mxu0 0.0
      %542 = vmatpush.msra.mxu0 0.0
      %543 = vmatpush.msra.mxu0 0.0
      %544 = vmatpush.msra.mxu0 0.0
      %545 = vmatpush.msra.mxu0 0.0
      %546 = vmatpush.msra.mxu0 0.0
      %547 = vmatpush.msra.mxu0 0.0
      %548 = vmatpush.msra.mxu0 0.0
      %549 = vmatpush.msra.mxu0 0.0
      %550 = vmatpush.msra.mxu0 %v444
      %551 = vmatmul.f32.gmra.mxu0 %v461
      %v552 = vpop.f32.mrf.mxu0
      %v553 = vadd.f32 0.0, %v552
      %554 = vmatmul.f32.gmra.mxu0 %v464
      %v555 = vpop.f32.mrf.mxu0
      %v556 = vadd.f32 0.0, %v555
      %557 = vdwg.mxu0
      %558 = vmatpush.msra.mxu0 0.0
      %559 = vmatpush.msra.mxu0 0.0
      %560 = vmatpush.msra.mxu0 0.0
      %561 = vmatpush.msra.mxu0 0.0
      %562 = vmatpush.msra.mxu0 0.0
      %563 = vmatpush.msra.mxu0 0.0
      %564 = vmatpush.msra.mxu0 0.0
      %565 = vmatpush.msra.mxu0 0.0
      %566 = vmatpush.msra.mxu0 0.0
      %567 = vmatpush.msra.mxu0 0.0
      %568 = vmatpush.msra.mxu0 0.0
      %569 = vmatpush.msra.mxu0 0.0
      %570 = vmatpush.msra.mxu0 0.0
      %571 = vmatpush.msra.mxu0 0.0
      %572 = vmatpush.msra.mxu0 0.0
      %573 = vmatpush.msra.mxu0 %v447
      %574 = vmatmul.f32.gmra.mxu0 %v461
      %v575 = vpop.f32.mrf.mxu0
      %v576 = vadd.f32 0.0, %v575
      %577 = vmatmul.f32.gmra.mxu0 %v464
      %v578 = vpop.f32.mrf.mxu0
      %v579 = vadd.f32 0.0, %v578
      %580 = vdwg.mxu0
      %581 = vmatpush.msra.mxu0 0.0
      %582 = vmatpush.msra.mxu0 0.0
      %583 = vmatpush.msra.mxu0 0.0
      %584 = vmatpush.msra.mxu0 0.0
      %585 = vmatpush.msra.mxu0 0.0
      %586 = vmatpush.msra.mxu0 0.0
      %587 = vmatpush.msra.mxu0 0.0
      %588 = vmatpush.msra.mxu0 0.0
      %589 = vmatpush.msra.mxu0 0.0
      %590 = vmatpush.msra.mxu0 0.0
      %591 = vmatpush.msra.mxu0 0.0
      %592 = vmatpush.msra.mxu0 0.0
      %593 = vmatpush.msra.mxu0 0.0
      %594 = vmatpush.msra.mxu0 0.0
      %595 = vmatpush.msra.mxu0 0.0
      %596 = vmatpush.msra.mxu0 %v450
      %597 = vmatmul.f32.gmra.mxu0 %v461
      %v598 = vpop.f32.mrf.mxu0
      %v599 = vadd.f32 0.0, %v598
      %600 = vmatmul.f32.gmra.mxu0 %v464
      %v601 = vpop.f32.mrf.mxu0
      %v602 = vadd.f32 0.0, %v601
      %603 = vdwg.mxu0
      %604 = vmatpush.msra.mxu0 0.0
      %605 = vmatpush.msra.mxu0 0.0
      %606 = vmatpush.msra.mxu0 0.0
      %607 = vmatpush.msra.mxu0 0.0
      %608 = vmatpush.msra.mxu0 0.0
      %609 = vmatpush.msra.mxu0 0.0
      %610 = vmatpush.msra.mxu0 0.0
      %611 = vmatpush.msra.mxu0 0.0
      %612 = vmatpush.msra.mxu0 0.0
      %613 = vmatpush.msra.mxu0 0.0
      %614 = vmatpush.msra.mxu0 0.0
      %615 = vmatpush.msra.mxu0 0.0
      %616 = vmatpush.msra.mxu0 0.0
      %617 = vmatpush.msra.mxu0 0.0
      %618 = vmatpush.msra.mxu0 0.0
      %619 = vmatpush.msra.mxu0 %v453
      %620 = vmatmul.f32.gmra.mxu0 %v461
      %v621 = vpop.f32.mrf.mxu0
      %v622 = vadd.f32 0.0, %v621
      %623 = vmatmul.f32.gmra.mxu0 %v464
      %v624 = vpop.f32.mrf.mxu0
      %v625 = vadd.f32 0.0, %v624
      %626 = vdwg.mxu0
      %627 = vmatpush.msra.mxu0 0.0
      %628 = vmatpush.msra.mxu0 0.0
      %629 = vmatpush.msra.mxu0 0.0
      %630 = vmatpush.msra.mxu0 0.0
      %631 = vmatpush.msra.mxu0 0.0
      %632 = vmatpush.msra.mxu0 0.0
      %633 = vmatpush.msra.mxu0 0.0
      %634 = vmatpush.msra.mxu0 0.0
      %635 = vmatpush.msra.mxu0 0.0
      %636 = vmatpush.msra.mxu0 0.0
      %637 = vmatpush.msra.mxu0 0.0
      %638 = vmatpush.msra.mxu0 0.0
      %639 = vmatpush.msra.mxu0 0.0
      %640 = vmatpush.msra.mxu0 0.0
      %641 = vmatpush.msra.mxu0 0.0
      %642 = vmatpush.msra.mxu0 %v456
      %643 = vmatmul.f32.gmra.mxu0 %v461
      %v644 = vpop.f32.mrf.mxu0
      %v645 = vadd.f32 0.0, %v644
      %646 = vmatmul.f32.gmra.mxu0 %v464
      %v647 = vpop.f32.mrf.mxu0
      %v648 = vadd.f32 0.0, %v647
      %649 = vdwg.mxu0
      %v650 = vrot.slane %v530, 4
      %vm651 = vcmask 1047556
      %v652 = vsel %vm651, %v650, %v484
      %v653 = vrot.slane %v484, 4
      %v654 = vsel %vm651, %v530, %v653
      %v656 = vunpack.c.l.s4 1983009808
      %v657 = vunpack.c.0.s8 %v656
      %v658 = vperm.slane %v652, %v657
      %v660 = vunpack.c.l.s4 1983009808
      %v661 = vunpack.c.0.s8 %v660
      %v662 = vperm.slane %v654, %v661
      %v663 = vrot.slane %v553, 4
      %v664 = vsel %vm651, %v663, %v507
      %v665 = vrot.slane %v507, 4
      %v666 = vsel %vm651, %v553, %v665
      %v668 = vunpack.c.l.s4 1983009808
      %v669 = vunpack.c.0.s8 %v668
      %v670 = vperm.slane %v664, %v669
      %v672 = vunpack.c.l.s4 1983009808
      %v673 = vunpack.c.0.s8 %v672
      %v674 = vperm.slane %v666, %v673
      %v675 = vrot.slane %v622, 4
      %v676 = vsel %vm651, %v675, %v576
      %v677 = vrot.slane %v576, 4
      %v678 = vsel %vm651, %v622, %v677
      %v680 = vunpack.c.l.s4 1983009808
      %v681 = vunpack.c.0.s8 %v680
      %v682 = vperm.slane %v676, %v681
      %v684 = vunpack.c.l.s4 1983009808
      %v685 = vunpack.c.0.s8 %v684
      %v686 = vperm.slane %v678, %v685
      %v687 = vrot.slane %v645, 4
      %v688 = vsel %vm651, %v687, %v599
      %v689 = vrot.slane %v599, 4
      %v690 = vsel %vm651, %v645, %v689
      %v692 = vunpack.c.l.s4 1983009808
      %v693 = vunpack.c.0.s8 %v692
      %v694 = vperm.slane %v688, %v693
      %v696 = vunpack.c.l.s4 1983009808
      %v697 = vunpack.c.0.s8 %v696
      %v698 = vperm.slane %v690, %v697
      %v699 = vrot.slane %v670, 4
      %v700 = vsel %vm651, %v699, %v658
      %v701 = vrot.slane %v658, 4
      %v702 = vsel %vm651, %v670, %v701
      %v704 = vunpack.c.l.s4 1934713408
      %v705 = vunpack.c.0.s8 %v704
      %v706 = vperm.slane %v700, %v705
      %v708 = vunpack.c.l.s4 1934713408
      %v709 = vunpack.c.0.s8 %v708
      %v710 = vperm.slane %v702, %v709
      %v711 = vrot.slane %v674, 4
      %v712 = vsel %vm651, %v711, %v662
      %v713 = vrot.slane %v662, 4
      %v714 = vsel %vm651, %v674, %v713
      %v716 = vunpack.c.l.s4 1934713408
      %v717 = vunpack.c.0.s8 %v716
      %v718 = vperm.slane %v712, %v717
      %v720 = vunpack.c.l.s4 1934713408
      %v721 = vunpack.c.0.s8 %v720
      %v722 = vperm.slane %v714, %v721
      %v723 = vrot.slane %v694, 4
      %v724 = vsel %vm651, %v723, %v682
      %v725 = vrot.slane %v682, 4
      %v726 = vsel %vm651, %v694, %v725
      %v728 = vunpack.c.l.s4 1934713408
      %v729 = vunpack.c.0.s8 %v728
      %v730 = vperm.slane %v724, %v729
      %v732 = vunpack.c.l.s4 1934713408
      %v733 = vunpack.c.0.s8 %v732
      %v734 = vperm.slane %v726, %v733
      %v735 = vrot.slane %v698, 4
      %v736 = vsel %vm651, %v735, %v686
      %v737 = vrot.slane %v686, 4
      %v738 = vsel %vm651, %v698, %v737
      %v740 = vunpack.c.l.s4 1934713408
      %v741 = vunpack.c.0.s8 %v740
      %v742 = vperm.slane %v736, %v741
      %v744 = vunpack.c.l.s4 1934713408
      %v745 = vunpack.c.0.s8 %v744
      %v746 = vperm.slane %v738, %v745
      %v747 = vrot.slane %v730, 4
      %v748 = vsel %vm651, %v747, %v706
      %v749 = vrot.slane %v706, 4
      %v750 = vsel %vm651, %v730, %v749
      %v751 = vrot.slane %v734, 4
      %v752 = vsel %vm651, %v751, %v710
      %v753 = vrot.slane %v710, 4
      %v754 = vsel %vm651, %v734, %v753
      %v755 = vrot.slane %v742, 4
      %v756 = vsel %vm651, %v755, %v718
      %v757 = vrot.slane %v718, 4
      %v758 = vsel %vm651, %v742, %v757
      %v759 = vrot.slane %v746, 4
      %v760 = vsel %vm651, %v759, %v722
      %v761 = vrot.slane %v722, 4
      %v762 = vsel %vm651, %v746, %v761
      %v763 = vrot.slane %v533, 4
      %v764 = vsel %vm651, %v763, %v487
      %v765 = vrot.slane %v487, 4
      %v766 = vsel %vm651, %v533, %v765
      %v768 = vunpack.c.l.s4 1983009808
      %v769 = vunpack.c.0.s8 %v768
      %v770 = vperm.slane %v764, %v769
      %v772 = vunpack.c.l.s4 1983009808
      %v773 = vunpack.c.0.s8 %v772
      %v774 = vperm.slane %v766, %v773
      %v775 = vrot.slane %v556, 4
      %v776 = vsel %vm651, %v775, %v510
      %v777 = vrot.slane %v510, 4
      %v778 = vsel %vm651, %v556, %v777
      %v780 = vunpack.c.l.s4 1983009808
      %v781 = vunpack.c.0.s8 %v780
      %v782 = vperm.slane %v776, %v781
      %v784 = vunpack.c.l.s4 1983009808
      %v785 = vunpack.c.0.s8 %v784
      %v786 = vperm.slane %v778, %v785
      %v787 = vrot.slane %v625, 4
      %v788 = vsel %vm651, %v787, %v579
      %v789 = vrot.slane %v579, 4
      %v790 = vsel %vm651, %v625, %v789
      %v792 = vunpack.c.l.s4 1983009808
      %v793 = vunpack.c.0.s8 %v792
      %v794 = vperm.slane %v788, %v793
      %v796 = vunpack.c.l.s4 1983009808
      %v797 = vunpack.c.0.s8 %v796
      %v798 = vperm.slane %v790, %v797
      %v799 = vrot.slane %v648, 4
      %v800 = vsel %vm651, %v799, %v602
      %v801 = vrot.slane %v602, 4
      %v802 = vsel %vm651, %v648, %v801
      %v804 = vunpack.c.l.s4 1983009808
      %v805 = vunpack.c.0.s8 %v804
      %v806 = vperm.slane %v800, %v805
      %v808 = vunpack.c.l.s4 1983009808
      %v809 = vunpack.c.0.s8 %v808
      %v810 = vperm.slane %v802, %v809
      %v811 = vrot.slane %v782, 4
      %v812 = vsel %vm651, %v811, %v770
      %v813 = vrot.slane %v770, 4
      %v814 = vsel %vm651, %v782, %v813
      %v816 = vunpack.c.l.s4 1934713408
      %v817 = vunpack.c.0.s8 %v816
      %v818 = vperm.slane %v812, %v817
      %v820 = vunpack.c.l.s4 1934713408
      %v821 = vunpack.c.0.s8 %v820
      %v822 = vperm.slane %v814, %v821
      %v823 = vrot.slane %v786, 4
      %v824 = vsel %vm651, %v823, %v774
      %v825 = vrot.slane %v774, 4
      %v826 = vsel %vm651, %v786, %v825
      %v828 = vunpack.c.l.s4 1934713408
      %v829 = vunpack.c.0.s8 %v828
      %v830 = vperm.slane %v824, %v829
      %v832 = vunpack.c.l.s4 1934713408
      %v833 = vunpack.c.0.s8 %v832
      %v834 = vperm.slane %v826, %v833
      %v835 = vrot.slane %v806, 4
      %v836 = vsel %vm651, %v835, %v794
      %v837 = vrot.slane %v794, 4
      %v838 = vsel %vm651, %v806, %v837
      %v840 = vunpack.c.l.s4 1934713408
      %v841 = vunpack.c.0.s8 %v840
      %v842 = vperm.slane %v836, %v841
      %v844 = vunpack.c.l.s4 1934713408
      %v845 = vunpack.c.0.s8 %v844
      %v846 = vperm.slane %v838, %v845
      %v847 = vrot.slane %v810, 4
      %v848 = vsel %vm651, %v847, %v798
      %v849 = vrot.slane %v798, 4
      %v850 = vsel %vm651, %v810, %v849
      %v852 = vunpack.c.l.s4 1934713408
      %v853 = vunpack.c.0.s8 %v852
      %v854 = vperm.slane %v848, %v853
      %v856 = vunpack.c.l.s4 1934713408
      %v857 = vunpack.c.0.s8 %v856
      %v858 = vperm.slane %v850, %v857
      %v859 = vrot.slane %v842, 4
      %v860 = vsel %vm651, %v859, %v818
      %v861 = vrot.slane %v818, 4
      %v862 = vsel %vm651, %v842, %v861
      %v863 = vrot.slane %v846, 4
      %v864 = vsel %vm651, %v863, %v822
      %v865 = vrot.slane %v822, 4
      %v866 = vsel %vm651, %v846, %v865
      %v867 = vrot.slane %v854, 4
      %v868 = vsel %vm651, %v867, %v830
      %v869 = vrot.slane %v830, 4
      %v870 = vsel %vm651, %v854, %v869
      %v871 = vrot.slane %v858, 4
      %v872 = vsel %vm651, %v871, %v834
      %v873 = vrot.slane %v834, 4
      %v874 = vsel %vm651, %v858, %v873
      %876 = vrot.lane.b32.xlu0 %v750, 16
      %v877 = vpop.permute.xlu0 %876
      %880 = vrot.lane.b32.xlu0 %v752, 32
      %v881 = vpop.permute.xlu0 %880
      %884 = vrot.lane.b32.xlu0 %v754, 48
      %v885 = vpop.permute.xlu0 %884
      %888 = vrot.lane.b32.xlu0 %v756, 64
      %v889 = vpop.permute.xlu0 %888
      %892 = vrot.lane.b32.xlu0 %v758, 80
      %v893 = vpop.permute.xlu0 %892
      %896 = vrot.lane.b32.xlu0 %v760, 96
      %v897 = vpop.permute.xlu0 %896
      %900 = vrot.lane.b32.xlu0 %v762, 112
      %v901 = vpop.permute.xlu0 %900
      %904 = vrot.lane.b32.xlu0 %v862, 16
      %v905 = vpop.permute.xlu0 %904
      %908 = vrot.lane.b32.xlu0 %v864, 32
      %v909 = vpop.permute.xlu0 %908
      %912 = vrot.lane.b32.xlu0 %v866, 48
      %v913 = vpop.permute.xlu0 %912
      %916 = vrot.lane.b32.xlu0 %v868, 64
      %v917 = vpop.permute.xlu0 %916
      %920 = vrot.lane.b32.xlu0 %v870, 80
      %v921 = vpop.permute.xlu0 %920
      %924 = vrot.lane.b32.xlu0 %v872, 96
      %v925 = vpop.permute.xlu0 %924
      %928 = vrot.lane.b32.xlu0 %v874, 112
      %v929 = vpop.permute.xlu0 %928
      %vm931 = vcmask 130048
      %v932 = vsel %vm931, %v748, %v877
      %vm933 = vcmask 261120
      %v934 = vsel %vm933, %v932, %v881
      %vm935 = vcmask 392192
      %v936 = vsel %vm935, %v934, %v885
      %vm937 = vcmask 523264
      %v938 = vsel %vm937, %v936, %v889
      %vm939 = vcmask 654336
      %v940 = vsel %vm939, %v938, %v893
      %vm941 = vcmask 785408
      %v942 = vsel %vm941, %v940, %v897
      %vm943 = vcmask 916480
      %v944 = vsel %vm943, %v942, %v901
      %v945 = vsel %vm931, %v860, %v905
      %v946 = vsel %vm933, %v945, %v909
      %v947 = vsel %vm935, %v946, %v913
      %v948 = vsel %vm937, %v947, %v917
      %v949 = vsel %vm939, %v948, %v921
      %v950 = vsel %vm941, %v949, %v925
      %v951 = vsel %vm943, %v950, %v929
      %v952 = vld [vmem:[%s374] sm:$0xff]
      %954 = vst [vmem:[#allocation1] ss:$2 sm:$0xff] %v952
      %v955 = vld.sshfl [vmem:[#allocation1] sm:$0xff pattern:$0x75316420]
      %v956 = vld.sshfl [vmem:[#allocation1 + $0x8] sm:$0xff pattern:$0x75316420]
      %957 = vrot.lane.b32.xlu0 %v955, 17
      %v958 = vpop.permute.xlu0 %957
      %959 = vrot.lane.b32.xlu0 %v956, 17
      %v960 = vpop.permute.xlu0 %959
      %vm961 = vcmask 138240
      %v962 = vsel %vm961, %v958, %v960
      %v965 = vsel %vm961, 0.0, %v958
      %v966 = vsel %vm961, %v960, 0.0
      %969 = vrot.lane.b32.xlu0 %v944, 17
      %v970 = vpop.permute.xlu0 %969
      %971 = vrot.lane.b32.xlu0 %v951, 17
      %v972 = vpop.permute.xlu0 %971
      %v973 = vsel %vm961, %v970, %v972
      %v977 = vsel %vm961, 0.0, %v970
      %v978 = vsel %vm961, %v972, 0.0
      %v979 = vld [vmem:[%s7] sm:$0xf]
      %v980 = vld [vmem:[%s5] sm:$0xf]
      %v981 = vld [vmem:[%s6] sm:$0xf]
      %v983 = vsel %vm392, %v981, 0
      %985 = vmatpush.msra.mxu0 0.0
      %986 = vmatpush.msra.mxu0 0.0
      %987 = vmatpush.msra.mxu0 0.0
      %988 = vmatpush.msra.mxu0 0.0
      %989 = vmatpush.msra.mxu0 0.0
      %990 = vmatpush.msra.mxu0 0.0
      %991 = vmatpush.msra.mxu0 0.0
      %992 = vmatpush.msra.mxu0 0.0
      %993 = vmatpush.msra.mxu0 0.0
      %994 = vmatpush.msra.mxu0 0.0
      %995 = vmatpush.msra.mxu0 0.0
      %996 = vmatpush.msra.mxu0 0.0
      %997 = vmatpush.msra.mxu0 0.0
      %998 = vmatpush.msra.mxu0 0.0
      %999 = vmatpush.msra.mxu0 0.0
      %1000 = vmatpush.msra.mxu0 %v977
      %1001 = vmatmul.f32.gmra.mxu0 %v983
      %v1002 = vpop.f32.mrf.mxu0
      %v1003 = vadd.f32 0.0, %v1002
      %1004 = vdwg.mxu0
      %1005 = vmatpush.msra.mxu0 0.0
      %1006 = vmatpush.msra.mxu0 0.0
      %1007 = vmatpush.msra.mxu0 0.0
      %1008 = vmatpush.msra.mxu0 0.0
      %1009 = vmatpush.msra.mxu0 0.0
      %1010 = vmatpush.msra.mxu0 0.0
      %1011 = vmatpush.msra.mxu0 0.0
      %1012 = vmatpush.msra.mxu0 0.0
      %1013 = vmatpush.msra.mxu0 0.0
      %1014 = vmatpush.msra.mxu0 0.0
      %1015 = vmatpush.msra.mxu0 0.0
      %1016 = vmatpush.msra.mxu0 0.0
      %1017 = vmatpush.msra.mxu0 0.0
      %1018 = vmatpush.msra.mxu0 0.0
      %1019 = vmatpush.msra.mxu0 0.0
      %1020 = vmatpush.msra.mxu0 %v973
      %1021 = vmatmul.f32.gmra.mxu0 %v983
      %v1022 = vpop.f32.mrf.mxu0
      %v1023 = vadd.f32 0.0, %v1022
      %1024 = vdwg.mxu0
      %vm1025 = vcmask 31744
      %v1027 = vsel %vm1025, %v980, 0
      %vm1029 = vcmask 1043456
      %v1031 = vsel %vm1029, %v965, 0
      %v1033 = vsel %vm1029, %v962, 0
      %1035 = vmatpush.msra.mxu0 0.0
      %1036 = vmatpush.msra.mxu0 0.0
      %1037 = vmatpush.msra.mxu0 0.0
      %1038 = vmatpush.msra.mxu0 0.0
      %1039 = vmatpush.msra.mxu0 0.0
      %1040 = vmatpush.msra.mxu0 0.0
      %1041 = vmatpush.msra.mxu0 0.0
      %1042 = vmatpush.msra.mxu0 0.0
      %1043 = vmatpush.msra.mxu0 0.0
      %1044 = vmatpush.msra.mxu0 0.0
      %1045 = vmatpush.msra.mxu0 0.0
      %1046 = vmatpush.msra.mxu0 0.0
      %1047 = vmatpush.msra.mxu0 0.0
      %1048 = vmatpush.msra.mxu0 0.0
      %1049 = vmatpush.msra.mxu0 0.0
      %1050 = vmatpush.msra.mxu0 %v1031
      %1051 = vmatmul.f32.gmra.mxu0 %v1027
      %v1052 = vpop.f32.mrf.mxu0
      %v1053 = vadd.f32 %v1003, %v1052
      %1054 = vdwg.mxu0
      %1055 = vmatpush.msra.mxu0 0.0
      %1056 = vmatpush.msra.mxu0 0.0
      %1057 = vmatpush.msra.mxu0 0.0
      %1058 = vmatpush.msra.mxu0 0.0
      %1059 = vmatpush.msra.mxu0 0.0
      %1060 = vmatpush.msra.mxu0 0.0
      %1061 = vmatpush.msra.mxu0 0.0
      %1062 = vmatpush.msra.mxu0 0.0
      %1063 = vmatpush.msra.mxu0 0.0
      %1064 = vmatpush.msra.mxu0 0.0
      %1065 = vmatpush.msra.mxu0 0.0
      %1066 = vmatpush.msra.mxu0 0.0
      %1067 = vmatpush.msra.mxu0 0.0
      %1068 = vmatpush.msra.mxu0 0.0
      %1069 = vmatpush.msra.mxu0 0.0
      %1070 = vmatpush.msra.mxu0 %v1033
      %1071 = vmatmul.f32.gmra.mxu0 %v1027
      %v1072 = vpop.f32.mrf.mxu0
      %v1073 = vadd.f32 %v1023, %v1072
      %1074 = vdwg.mxu0
      %s1075 = scalar_lea.vmem %s5, 12
      %v1076 = vld [vmem:[%s1075] sm:$0xf]
      %1078 = vrot.lane.b32.xlu0 %v965, 112
      %v1079 = vpop.permute.xlu0 %1078
      %1080 = vrot.lane.b32.xlu0 %v962, 112
      %v1081 = vpop.permute.xlu0 %1080
      %1082 = vrot.lane.b32.xlu0 %v966, 112
      %v1083 = vpop.permute.xlu0 %1082
      %v1084 = vsel %vm943, %v1079, %v1081
      %v1085 = vsel %vm943, %v1081, %v1083
      %v1087 = vsel %vm1025, %v1076, 0
      %v1089 = vsel %vm1029, %v1084, 0
      %v1091 = vsel %vm1029, %v1085, 0
      %1093 = vmatpush.msra.mxu0 0.0
      %1094 = vmatpush.msra.mxu0 0.0
      %1095 = vmatpush.msra.mxu0 0.0
      %1096 = vmatpush.msra.mxu0 0.0
      %1097 = vmatpush.msra.mxu0 0.0
      %1098 = vmatpush.msra.mxu0 0.0
      %1099 = vmatpush.msra.mxu0 0.0
      %1100 = vmatpush.msra.mxu0 0.0
      %1101 = vmatpush.msra.mxu0 0.0
      %1102 = vmatpush.msra.mxu0 0.0
      %1103 = vmatpush.msra.mxu0 0.0
      %1104 = vmatpush.msra.mxu0 0.0
      %1105 = vmatpush.msra.mxu0 0.0
      %1106 = vmatpush.msra.mxu0 0.0
      %1107 = vmatpush.msra.mxu0 0.0
      %1108 = vmatpush.msra.mxu0 %v1089
      %1109 = vmatmul.f32.gmra.mxu0 %v1087
      %v1110 = vpop.f32.mrf.mxu0
      %v1111 = vadd.f32 0.0, %v1110
      %1112 = vdwg.mxu0
      %1113 = vmatpush.msra.mxu0 0.0
      %1114 = vmatpush.msra.mxu0 0.0
      %1115 = vmatpush.msra.mxu0 0.0
      %1116 = vmatpush.msra.mxu0 0.0
      %1117 = vmatpush.msra.mxu0 0.0
      %1118 = vmatpush.msra.mxu0 0.0
      %1119 = vmatpush.msra.mxu0 0.0
      %1120 = vmatpush.msra.mxu0 0.0
      %1121 = vmatpush.msra.mxu0 0.0
      %1122 = vmatpush.msra.mxu0 0.0
      %1123 = vmatpush.msra.mxu0 0.0
      %1124 = vmatpush.msra.mxu0 0.0
      %1125 = vmatpush.msra.mxu0 0.0
      %1126 = vmatpush.msra.mxu0 0.0
      %1127 = vmatpush.msra.mxu0 0.0
      %1128 = vmatpush.msra.mxu0 %v1091
      %1129 = vmatmul.f32.gmra.mxu0 %v1087
      %v1130 = vpop.f32.mrf.mxu0
      %v1131 = vadd.f32 0.0, %v1130
      %1132 = vdwg.mxu0
      %v1133 = vadd.f32 %v1053, %v1111
      %v1134 = vadd.f32 %v1073, %v1131
      %s1135 = scalar_lea.vmem %s6, 12
      %v1136 = vld [vmem:[%s1135] sm:$0xf]
      %1139 = vrot.lane.b32.xlu0 %v977, 112
      %v1140 = vpop.permute.xlu0 %1139
      %1141 = vrot.lane.b32.xlu0 %v973, 112
      %v1142 = vpop.permute.xlu0 %1141
      %1143 = vrot.lane.b32.xlu0 %v978, 112
      %v1144 = vpop.permute.xlu0 %1143
      %v1145 = vsel %vm943, %v1140, %v1142
      %v1146 = vsel %vm943, %v1142, %v1144
      %v1150 = vsel %vm392, %v1136, 0
      %1152 = vmatpush.msra.mxu0 0.0
      %1153 = vmatpush.msra.mxu0 0.0
      %1154 = vmatpush.msra.mxu0 0.0
      %1155 = vmatpush.msra.mxu0 0.0
      %1156 = vmatpush.msra.mxu0 0.0
      %1157 = vmatpush.msra.mxu0 0.0
      %1158 = vmatpush.msra.mxu0 0.0
      %1159 = vmatpush.msra.mxu0 0.0
      %1160 = vmatpush.msra.mxu0 0.0
      %1161 = vmatpush.msra.mxu0 0.0
      %1162 = vmatpush.msra.mxu0 0.0
      %1163 = vmatpush.msra.mxu0 0.0
      %1164 = vmatpush.msra.mxu0 0.0
      %1165 = vmatpush.msra.mxu0 0.0
      %1166 = vmatpush.msra.mxu0 0.0
      %1167 = vmatpush.msra.mxu0 %v1145
      %1168 = vmatmul.f32.gmra.mxu0 %v1150
      %v1169 = vpop.f32.mrf.mxu0
      %v1170 = vadd.f32 0.0, %v1169
      %1171 = vdwg.mxu0
      %1172 = vmatpush.msra.mxu0 0.0
      %1173 = vmatpush.msra.mxu0 0.0
      %1174 = vmatpush.msra.mxu0 0.0
      %1175 = vmatpush.msra.mxu0 0.0
      %1176 = vmatpush.msra.mxu0 0.0
      %1177 = vmatpush.msra.mxu0 0.0
      %1178 = vmatpush.msra.mxu0 0.0
      %1179 = vmatpush.msra.mxu0 0.0
      %1180 = vmatpush.msra.mxu0 0.0
      %1181 = vmatpush.msra.mxu0 0.0
      %1182 = vmatpush.msra.mxu0 0.0
      %1183 = vmatpush.msra.mxu0 0.0
      %1184 = vmatpush.msra.mxu0 0.0
      %1185 = vmatpush.msra.mxu0 0.0
      %1186 = vmatpush.msra.mxu0 0.0
      %1187 = vmatpush.msra.mxu0 %v1146
      %1188 = vmatmul.f32.gmra.mxu0 %v1150
      %v1189 = vpop.f32.mrf.mxu0
      %v1190 = vadd.f32 0.0, %v1189
      %1191 = vdwg.mxu0
      %v1192 = vadd.f32 %v1133, %v1170
      %v1193 = vadd.f32 %v1134, %v1190
      %s1194 = scalar_lea.vmem %s5, 24
      %v1195 = vld [vmem:[%s1194] sm:$0xf]
      %1196 = vrot.lane.b32.xlu0 %v965, 96
      %v1197 = vpop.permute.xlu0 %1196
      %1198 = vrot.lane.b32.xlu0 %v962, 96
      %v1199 = vpop.permute.xlu0 %1198
      %1200 = vrot.lane.b32.xlu0 %v966, 96
      %v1201 = vpop.permute.xlu0 %1200
      %v1202 = vsel %vm941, %v1197, %v1199
      %v1203 = vsel %vm941, %v1199, %v1201
      %v1205 = vsel %vm1025, %v1195, 0
      %v1207 = vsel %vm1029, %v1202, 0
      %v1209 = vsel %vm1029, %v1203, 0
      %1211 = vmatpush.msra.mxu0 0.0
      %1212 = vmatpush.msra.mxu0 0.0
      %1213 = vmatpush.msra.mxu0 0.0
      %1214 = vmatpush.msra.mxu0 0.0
      %1215 = vmatpush.msra.mxu0 0.0
      %1216 = vmatpush.msra.mxu0 0.0
      %1217 = vmatpush.msra.mxu0 0.0
      %1218 = vmatpush.msra.mxu0 0.0
      %1219 = vmatpush.msra.mxu0 0.0
      %1220 = vmatpush.msra.mxu0 0.0
      %1221 = vmatpush.msra.mxu0 0.0
      %1222 = vmatpush.msra.mxu0 0.0
      %1223 = vmatpush.msra.mxu0 0.0
      %1224 = vmatpush.msra.mxu0 0.0
      %1225 = vmatpush.msra.mxu0 0.0
      %1226 = vmatpush.msra.mxu0 %v1207
      %1227 = vmatmul.f32.gmra.mxu0 %v1205
      %v1228 = vpop.f32.mrf.mxu0
      %v1229 = vadd.f32 0.0, %v1228
      %1230 = vdwg.mxu0
      %1231 = vmatpush.msra.mxu0 0.0
      %1232 = vmatpush.msra.mxu0 0.0
      %1233 = vmatpush.msra.mxu0 0.0
      %1234 = vmatpush.msra.mxu0 0.0
      %1235 = vmatpush.msra.mxu0 0.0
      %1236 = vmatpush.msra.mxu0 0.0
      %1237 = vmatpush.msra.mxu0 0.0
      %1238 = vmatpush.msra.mxu0 0.0
      %1239 = vmatpush.msra.mxu0 0.0
      %1240 = vmatpush.msra.mxu0 0.0
      %1241 = vmatpush.msra.mxu0 0.0
      %1242 = vmatpush.msra.mxu0 0.0
      %1243 = vmatpush.msra.mxu0 0.0
      %1244 = vmatpush.msra.mxu0 0.0
      %1245 = vmatpush.msra.mxu0 0.0
      %1246 = vmatpush.msra.mxu0 %v1209
      %1247 = vmatmul.f32.gmra.mxu0 %v1205
      %v1248 = vpop.f32.mrf.mxu0
      %v1249 = vadd.f32 0.0, %v1248
      %1250 = vdwg.mxu0
      %v1251 = vadd.f32 %v1192, %v1229
      %v1252 = vadd.f32 %v1193, %v1249
      %s1253 = scalar_lea.vmem %s6, 24
      %v1254 = vld [vmem:[%s1253] sm:$0xf]
      %1255 = vrot.lane.b32.xlu0 %v977, 96
      %v1256 = vpop.permute.xlu0 %1255
      %1257 = vrot.lane.b32.xlu0 %v973, 96
      %v1258 = vpop.permute.xlu0 %1257
      %1259 = vrot.lane.b32.xlu0 %v978, 96
      %v1260 = vpop.permute.xlu0 %1259
      %v1261 = vsel %vm941, %v1256, %v1258
      %v1262 = vsel %vm941, %v1258, %v1260
      %v1266 = vsel %vm392, %v1254, 0
      %1268 = vmatpush.msra.mxu0 0.0
      %1269 = vmatpush.msra.mxu0 0.0
      %1270 = vmatpush.msra.mxu0 0.0
      %1271 = vmatpush.msra.mxu0 0.0
      %1272 = vmatpush.msra.mxu0 0.0
      %1273 = vmatpush.msra.mxu0 0.0
      %1274 = vmatpush.msra.mxu0 0.0
      %1275 = vmatpush.msra.mxu0 0.0
      %1276 = vmatpush.msra.mxu0 0.0
      %1277 = vmatpush.msra.mxu0 0.0
      %1278 = vmatpush.msra.mxu0 0.0
      %1279 = vmatpush.msra.mxu0 0.0
      %1280 = vmatpush.msra.mxu0 0.0
      %1281 = vmatpush.msra.mxu0 0.0
      %1282 = vmatpush.msra.mxu0 0.0
      %1283 = vmatpush.msra.mxu0 %v1261
      %1284 = vmatmul.f32.gmra.mxu0 %v1266
      %v1285 = vpop.f32.mrf.mxu0
      %v1286 = vadd.f32 0.0, %v1285
      %1287 = vdwg.mxu0
      %1288 = vmatpush.msra.mxu0 0.0
      %1289 = vmatpush.msra.mxu0 0.0
      %1290 = vmatpush.msra.mxu0 0.0
      %1291 = vmatpush.msra.mxu0 0.0
      %1292 = vmatpush.msra.mxu0 0.0
      %1293 = vmatpush.msra.mxu0 0.0
      %1294 = vmatpush.msra.mxu0 0.0
      %1295 = vmatpush.msra.mxu0 0.0
      %1296 = vmatpush.msra.mxu0 0.0
      %1297 = vmatpush.msra.mxu0 0.0
      %1298 = vmatpush.msra.mxu0 0.0
      %1299 = vmatpush.msra.mxu0 0.0
      %1300 = vmatpush.msra.mxu0 0.0
      %1301 = vmatpush.msra.mxu0 0.0
      %1302 = vmatpush.msra.mxu0 0.0
      %1303 = vmatpush.msra.mxu0 %v1262
      %1304 = vmatmul.f32.gmra.mxu0 %v1266
      %v1305 = vpop.f32.mrf.mxu0
      %v1306 = vadd.f32 0.0, %v1305
      %1307 = vdwg.mxu0
      %v1308 = vadd.f32 %v1251, %v1286
      %v1309 = vadd.f32 %v1252, %v1306
      %v1311 = vperm.slane %v380, 0
      %v1312 = vperm.slane %v380, 1
      %v1315 = vmul.f32 %v1308, %v1311
      %v1316 = vmul.f32 %v1309, %v1312
      %1318 = vset.pattern.permute.xlu0 0
      %1319 = vperm.xlu0 %1318, %v979
      %v1320 = vpop.permute.xlu0 %1319
      %v1322 = vadd.f32 %v1320, %v1315
      %v1323 = vadd.f32 %v1320, %v1316
      %s1324 = scalar_lea.vmem %s5, 4
      %v1325 = vld [vmem:[%s1324] sm:$0xf]
      %s1326 = scalar_lea.vmem %s6, 4
      %v1327 = vld [vmem:[%s1326] sm:$0xf]
      %1328 = vrot.lane.b32.xlu0 %v977, 127
      %v1329 = vpop.permute.xlu0 %1328
      %1330 = vrot.lane.b32.xlu0 %v973, 127
      %v1331 = vpop.permute.xlu0 %1330
      %1332 = vrot.lane.b32.xlu0 %v978, 127
      %v1333 = vpop.permute.xlu0 %1332
      %vm1334 = vcmask 1039360
      %v1335 = vsel %vm1334, %v1329, %v1331
      %v1336 = vsel %vm1334, %v1331, %v1333
      %v1340 = vsel %vm392, %v1327, 0
      %1342 = vmatpush.msra.mxu0 0.0
      %1343 = vmatpush.msra.mxu0 0.0
      %1344 = vmatpush.msra.mxu0 0.0
      %1345 = vmatpush.msra.mxu0 0.0
      %1346 = vmatpush.msra.mxu0 0.0
      %1347 = vmatpush.msra.mxu0 0.0
      %1348 = vmatpush.msra.mxu0 0.0
      %1349 = vmatpush.msra.mxu0 0.0
      %1350 = vmatpush.msra.mxu0 0.0
      %1351 = vmatpush.msra.mxu0 0.0
      %1352 = vmatpush.msra.mxu0 0.0
      %1353 = vmatpush.msra.mxu0 0.0
      %1354 = vmatpush.msra.mxu0 0.0
      %1355 = vmatpush.msra.mxu0 0.0
      %1356 = vmatpush.msra.mxu0 0.0
      %1357 = vmatpush.msra.mxu0 %v1335
      %1358 = vmatmul.f32.gmra.mxu0 %v1340
      %v1359 = vpop.f32.mrf.mxu0
      %v1360 = vadd.f32 0.0, %v1359
      %1361 = vdwg.mxu0
      %1362 = vmatpush.msra.mxu0 0.0
      %1363 = vmatpush.msra.mxu0 0.0
      %1364 = vmatpush.msra.mxu0 0.0
      %1365 = vmatpush.msra.mxu0 0.0
      %1366 = vmatpush.msra.mxu0 0.0
      %1367 = vmatpush.msra.mxu0 0.0
      %1368 = vmatpush.msra.mxu0 0.0
      %1369 = vmatpush.msra.mxu0 0.0
      %1370 = vmatpush.msra.mxu0 0.0
      %1371 = vmatpush.msra.mxu0 0.0
      %1372 = vmatpush.msra.mxu0 0.0
      %1373 = vmatpush.msra.mxu0 0.0
      %1374 = vmatpush.msra.mxu0 0.0
      %1375 = vmatpush.msra.mxu0 0.0
      %1376 = vmatpush.msra.mxu0 0.0
      %1377 = vmatpush.msra.mxu0 %v1336
      %1378 = vmatmul.f32.gmra.mxu0 %v1340
      %v1379 = vpop.f32.mrf.mxu0
      %v1380 = vadd.f32 0.0, %v1379
      %1381 = vdwg.mxu0
      %1382 = vrot.lane.b32.xlu0 %v965, 127
      %v1383 = vpop.permute.xlu0 %1382
      %1384 = vrot.lane.b32.xlu0 %v962, 127
      %v1385 = vpop.permute.xlu0 %1384
      %1386 = vrot.lane.b32.xlu0 %v966, 127
      %v1387 = vpop.permute.xlu0 %1386
      %v1388 = vsel %vm1334, %v1383, %v1385
      %v1389 = vsel %vm1334, %v1385, %v1387
      %v1391 = vsel %vm1025, %v1325, 0
      %v1393 = vsel %vm1029, %v1388, 0
      %v1395 = vsel %vm1029, %v1389, 0
      %1397 = vmatpush.msra.mxu0 0.0
      %1398 = vmatpush.msra.mxu0 0.0
      %1399 = vmatpush.msra.mxu0 0.0
      %1400 = vmatpush.msra.mxu0 0.0
      %1401 = vmatpush.msra.mxu0 0.0
      %1402 = vmatpush.msra.mxu0 0.0
      %1403 = vmatpush.msra.mxu0 0.0
      %1404 = vmatpush.msra.mxu0 0.0
      %1405 = vmatpush.msra.mxu0 0.0
      %1406 = vmatpush.msra.mxu0 0.0
      %1407 = vmatpush.msra.mxu0 0.0
      %1408 = vmatpush.msra.mxu0 0.0
      %1409 = vmatpush.msra.mxu0 0.0
      %1410 = vmatpush.msra.mxu0 0.0
      %1411 = vmatpush.msra.mxu0 0.0
      %1412 = vmatpush.msra.mxu0 %v1393
      %1413 = vmatmul.f32.gmra.mxu0 %v1391
      %v1414 = vpop.f32.mrf.mxu0
      %v1415 = vadd.f32 %v1360, %v1414
      %1416 = vdwg.mxu0
      %1417 = vmatpush.msra.mxu0 0.0
      %1418 = vmatpush.msra.mxu0 0.0
      %1419 = vmatpush.msra.mxu0 0.0
      %1420 = vmatpush.msra.mxu0 0.0
      %1421 = vmatpush.msra.mxu0 0.0
      %1422 = vmatpush.msra.mxu0 0.0
      %1423 = vmatpush.msra.mxu0 0.0
      %1424 = vmatpush.msra.mxu0 0.0
      %1425 = vmatpush.msra.mxu0 0.0
      %1426 = vmatpush.msra.mxu0 0.0
      %1427 = vmatpush.msra.mxu0 0.0
      %1428 = vmatpush.msra.mxu0 0.0
      %1429 = vmatpush.msra.mxu0 0.0
      %1430 = vmatpush.msra.mxu0 0.0
      %1431 = vmatpush.msra.mxu0 0.0
      %1432 = vmatpush.msra.mxu0 %v1395
      %1433 = vmatmul.f32.gmra.mxu0 %v1391
      %v1434 = vpop.f32.mrf.mxu0
      %v1435 = vadd.f32 %v1380, %v1434
      %1436 = vdwg.mxu0
      %s1437 = scalar_lea.vmem %s5, 16
      %v1438 = vld [vmem:[%s1437] sm:$0xf]
      %1439 = vrot.lane.b32.xlu0 %v965, 111
      %v1440 = vpop.permute.xlu0 %1439
      %1441 = vrot.lane.b32.xlu0 %v962, 111
      %v1442 = vpop.permute.xlu0 %1441
      %1443 = vrot.lane.b32.xlu0 %v966, 111
      %v1444 = vpop.permute.xlu0 %1443
      %vm1445 = vcmask 908288
      %v1446 = vsel %vm1445, %v1440, %v1442
      %v1447 = vsel %vm1445, %v1442, %v1444
      %v1449 = vsel %vm1025, %v1438, 0
      %v1451 = vsel %vm1029, %v1446, 0
      %v1453 = vsel %vm1029, %v1447, 0
      %1455 = vmatpush.msra.mxu0 0.0
      %1456 = vmatpush.msra.mxu0 0.0
      %1457 = vmatpush.msra.mxu0 0.0
      %1458 = vmatpush.msra.mxu0 0.0
      %1459 = vmatpush.msra.mxu0 0.0
      %1460 = vmatpush.msra.mxu0 0.0
      %1461 = vmatpush.msra.mxu0 0.0
      %1462 = vmatpush.msra.mxu0 0.0
      %1463 = vmatpush.msra.mxu0 0.0
      %1464 = vmatpush.msra.mxu0 0.0
      %1465 = vmatpush.msra.mxu0 0.0
      %1466 = vmatpush.msra.mxu0 0.0
      %1467 = vmatpush.msra.mxu0 0.0
      %1468 = vmatpush.msra.mxu0 0.0
      %1469 = vmatpush.msra.mxu0 0.0
      %1470 = vmatpush.msra.mxu0 %v1451
      %1471 = vmatmul.f32.gmra.mxu0 %v1449
      %v1472 = vpop.f32.mrf.mxu0
      %v1473 = vadd.f32 0.0, %v1472
      %1474 = vdwg.mxu0
      %1475 = vmatpush.msra.mxu0 0.0
      %1476 = vmatpush.msra.mxu0 0.0
      %1477 = vmatpush.msra.mxu0 0.0
      %1478 = vmatpush.msra.mxu0 0.0
      %1479 = vmatpush.msra.mxu0 0.0
      %1480 = vmatpush.msra.mxu0 0.0
      %1481 = vmatpush.msra.mxu0 0.0
      %1482 = vmatpush.msra.mxu0 0.0
      %1483 = vmatpush.msra.mxu0 0.0
      %1484 = vmatpush.msra.mxu0 0.0
      %1485 = vmatpush.msra.mxu0 0.0
      %1486 = vmatpush.msra.mxu0 0.0
      %1487 = vmatpush.msra.mxu0 0.0
      %1488 = vmatpush.msra.mxu0 0.0
      %1489 = vmatpush.msra.mxu0 0.0
      %1490 = vmatpush.msra.mxu0 %v1453
      %1491 = vmatmul.f32.gmra.mxu0 %v1449
      %v1492 = vpop.f32.mrf.mxu0
      %v1493 = vadd.f32 0.0, %v1492
      %1494 = vdwg.mxu0
      %v1495 = vadd.f32 %v1415, %v1473
      %v1496 = vadd.f32 %v1435, %v1493
      %s1497 = scalar_lea.vmem %s6, 16
      %v1498 = vld [vmem:[%s1497] sm:$0xf]
      %1499 = vrot.lane.b32.xlu0 %v977, 111
      %v1500 = vpop.permute.xlu0 %1499
      %1501 = vrot.lane.b32.xlu0 %v973, 111
      %v1502 = vpop.permute.xlu0 %1501
      %1503 = vrot.lane.b32.xlu0 %v978, 111
      %v1504 = vpop.permute.xlu0 %1503
      %v1505 = vsel %vm1445, %v1500, %v1502
      %v1506 = vsel %vm1445, %v1502, %v1504
      %v1510 = vsel %vm392, %v1498, 0
      %1512 = vmatpush.msra.mxu0 0.0
      %1513 = vmatpush.msra.mxu0 0.0
      %1514 = vmatpush.msra.mxu0 0.0
      %1515 = vmatpush.msra.mxu0 0.0
      %1516 = vmatpush.msra.mxu0 0.0
      %1517 = vmatpush.msra.mxu0 0.0
      %1518 = vmatpush.msra.mxu0 0.0
      %1519 = vmatpush.msra.mxu0 0.0
      %1520 = vmatpush.msra.mxu0 0.0
      %1521 = vmatpush.msra.mxu0 0.0
      %1522 = vmatpush.msra.mxu0 0.0
      %1523 = vmatpush.msra.mxu0 0.0
      %1524 = vmatpush.msra.mxu0 0.0
      %1525 = vmatpush.msra.mxu0 0.0
      %1526 = vmatpush.msra.mxu0 0.0
      %1527 = vmatpush.msra.mxu0 %v1505
      %1528 = vmatmul.f32.gmra.mxu0 %v1510
      %v1529 = vpop.f32.mrf.mxu0
      %v1530 = vadd.f32 0.0, %v1529
      %1531 = vdwg.mxu0
      %1532 = vmatpush.msra.mxu0 0.0
      %1533 = vmatpush.msra.mxu0 0.0
      %1534 = vmatpush.msra.mxu0 0.0
      %1535 = vmatpush.msra.mxu0 0.0
      %1536 = vmatpush.msra.mxu0 0.0
      %1537 = vmatpush.msra.mxu0 0.0
      %1538 = vmatpush.msra.mxu0 0.0
      %1539 = vmatpush.msra.mxu0 0.0
      %1540 = vmatpush.msra.mxu0 0.0
      %1541 = vmatpush.msra.mxu0 0.0
      %1542 = vmatpush.msra.mxu0 0.0
      %1543 = vmatpush.msra.mxu0 0.0
      %1544 = vmatpush.msra.mxu0 0.0
      %1545 = vmatpush.msra.mxu0 0.0
      %1546 = vmatpush.msra.mxu0 0.0
      %1547 = vmatpush.msra.mxu0 %v1506
      %1548 = vmatmul.f32.gmra.mxu0 %v1510
      %v1549 = vpop.f32.mrf.mxu0
      %v1550 = vadd.f32 0.0, %v1549
      %1551 = vdwg.mxu0
      %v1552 = vadd.f32 %v1495, %v1530
      %v1553 = vadd.f32 %v1496, %v1550
      %s1554 = scalar_lea.vmem %s5, 28
      %v1555 = vld [vmem:[%s1554] sm:$0xf]
      %1556 = vrot.lane.b32.xlu0 %v965, 95
      %v1557 = vpop.permute.xlu0 %1556
      %1558 = vrot.lane.b32.xlu0 %v962, 95
      %v1559 = vpop.permute.xlu0 %1558
      %1560 = vrot.lane.b32.xlu0 %v966, 95
      %v1561 = vpop.permute.xlu0 %1560
      %vm1562 = vcmask 777216
      %v1563 = vsel %vm1562, %v1557, %v1559
      %v1564 = vsel %vm1562, %v1559, %v1561
      %v1566 = vsel %vm1025, %v1555, 0
      %v1568 = vsel %vm1029, %v1563, 0
      %v1570 = vsel %vm1029, %v1564, 0
      %1572 = vmatpush.msra.mxu0 0.0
      %1573 = vmatpush.msra.mxu0 0.0
      %1574 = vmatpush.msra.mxu0 0.0
      %1575 = vmatpush.msra.mxu0 0.0
      %1576 = vmatpush.msra.mxu0 0.0
      %1577 = vmatpush.msra.mxu0 0.0
      %1578 = vmatpush.msra.mxu0 0.0
      %1579 = vmatpush.msra.mxu0 0.0
      %1580 = vmatpush.msra.mxu0 0.0
      %1581 = vmatpush.msra.mxu0 0.0
      %1582 = vmatpush.msra.mxu0 0.0
      %1583 = vmatpush.msra.mxu0 0.0
      %1584 = vmatpush.msra.mxu0 0.0
      %1585 = vmatpush.msra.mxu0 0.0
      %1586 = vmatpush.msra.mxu0 0.0
      %1587 = vmatpush.msra.mxu0 %v1568
      %1588 = vmatmul.f32.gmra.mxu0 %v1566
      %v1589 = vpop.f32.mrf.mxu0
      %v1590 = vadd.f32 0.0, %v1589
      %1591 = vdwg.mxu0
      %1592 = vmatpush.msra.mxu0 0.0
      %1593 = vmatpush.msra.mxu0 0.0
      %1594 = vmatpush.msra.mxu0 0.0
      %1595 = vmatpush.msra.mxu0 0.0
      %1596 = vmatpush.msra.mxu0 0.0
      %1597 = vmatpush.msra.mxu0 0.0
      %1598 = vmatpush.msra.mxu0 0.0
      %1599 = vmatpush.msra.mxu0 0.0
      %1600 = vmatpush.msra.mxu0 0.0
      %1601 = vmatpush.msra.mxu0 0.0
      %1602 = vmatpush.msra.mxu0 0.0
      %1603 = vmatpush.msra.mxu0 0.0
      %1604 = vmatpush.msra.mxu0 0.0
      %1605 = vmatpush.msra.mxu0 0.0
      %1606 = vmatpush.msra.mxu0 0.0
      %1607 = vmatpush.msra.mxu0 %v1570
      %1608 = vmatmul.f32.gmra.mxu0 %v1566
      %v1609 = vpop.f32.mrf.mxu0
      %v1610 = vadd.f32 0.0, %v1609
      %1611 = vdwg.mxu0
      %v1612 = vadd.f32 %v1552, %v1590
      %v1613 = vadd.f32 %v1553, %v1610
      %s1614 = scalar_lea.vmem %s6, 28
      %v1615 = vld [vmem:[%s1614] sm:$0xf]
      %1616 = vrot.lane.b32.xlu0 %v977, 95
      %v1617 = vpop.permute.xlu0 %1616
      %1618 = vrot.lane.b32.xlu0 %v973, 95
      %v1619 = vpop.permute.xlu0 %1618
      %1620 = vrot.lane.b32.xlu0 %v978, 95
      %v1621 = vpop.permute.xlu0 %1620
      %v1622 = vsel %vm1562, %v1617, %v1619
      %v1623 = vsel %vm1562, %v1619, %v1621
      %v1627 = vsel %vm392, %v1615, 0
      %1629 = vmatpush.msra.mxu0 0.0
      %1630 = vmatpush.msra.mxu0 0.0
      %1631 = vmatpush.msra.mxu0 0.0
      %1632 = vmatpush.msra.mxu0 0.0
      %1633 = vmatpush.msra.mxu0 0.0
      %1634 = vmatpush.msra.mxu0 0.0
      %1635 = vmatpush.msra.mxu0 0.0
      %1636 = vmatpush.msra.mxu0 0.0
      %1637 = vmatpush.msra.mxu0 0.0
      %1638 = vmatpush.msra.mxu0 0.0
      %1639 = vmatpush.msra.mxu0 0.0
      %1640 = vmatpush.msra.mxu0 0.0
      %1641 = vmatpush.msra.mxu0 0.0
      %1642 = vmatpush.msra.mxu0 0.0
      %1643 = vmatpush.msra.mxu0 0.0
      %1644 = vmatpush.msra.mxu0 %v1622
      %1645 = vmatmul.f32.gmra.mxu0 %v1627
      %v1646 = vpop.f32.mrf.mxu0
      %v1647 = vadd.f32 0.0, %v1646
      %1648 = vdwg.mxu0
      %1649 = vmatpush.msra.mxu0 0.0
      %1650 = vmatpush.msra.mxu0 0.0
      %1651 = vmatpush.msra.mxu0 0.0
      %1652 = vmatpush.msra.mxu0 0.0
      %1653 = vmatpush.msra.mxu0 0.0
      %1654 = vmatpush.msra.mxu0 0.0
      %1655 = vmatpush.msra.mxu0 0.0
      %1656 = vmatpush.msra.mxu0 0.0
      %1657 = vmatpush.msra.mxu0 0.0
      %1658 = vmatpush.msra.mxu0 0.0
      %1659 = vmatpush.msra.mxu0 0.0
      %1660 = vmatpush.msra.mxu0 0.0
      %1661 = vmatpush.msra.mxu0 0.0
      %1662 = vmatpush.msra.mxu0 0.0
      %1663 = vmatpush.msra.mxu0 0.0
      %1664 = vmatpush.msra.mxu0 %v1623
      %1665 = vmatmul.f32.gmra.mxu0 %v1627
      %v1666 = vpop.f32.mrf.mxu0
      %v1667 = vadd.f32 0.0, %v1666
      %1668 = vdwg.mxu0
      %v1669 = vadd.f32 %v1612, %v1647
      %v1670 = vadd.f32 %v1613, %v1667
      %v1671 = vadd.f32 %v1322, %v1669
      %v1672 = vadd.f32 %v1323, %v1670
      %s1673 = scalar_lea.vmem %s5, 8
      %v1674 = vld [vmem:[%s1673] sm:$0xf]
      %s1675 = scalar_lea.vmem %s6, 8
      %v1676 = vld [vmem:[%s1675] sm:$0xf]
      %1677 = vrot.lane.b32.xlu0 %v977, 126
      %v1678 = vpop.permute.xlu0 %1677
      %1679 = vrot.lane.b32.xlu0 %v973, 126
      %v1680 = vpop.permute.xlu0 %1679
      %1681 = vrot.lane.b32.xlu0 %v978, 126
      %v1682 = vpop.permute.xlu0 %1681
      %vm1683 = vcmask 1031168
      %v1684 = vsel %vm1683, %v1678, %v1680
      %v1685 = vsel %vm1683, %v1680, %v1682
      %v1689 = vsel %vm392, %v1676, 0
      %1691 = vmatpush.msra.mxu0 0.0
      %1692 = vmatpush.msra.mxu0 0.0
      %1693 = vmatpush.msra.mxu0 0.0
      %1694 = vmatpush.msra.mxu0 0.0
      %1695 = vmatpush.msra.mxu0 0.0
      %1696 = vmatpush.msra.mxu0 0.0
      %1697 = vmatpush.msra.mxu0 0.0
      %1698 = vmatpush.msra.mxu0 0.0
      %1699 = vmatpush.msra.mxu0 0.0
      %1700 = vmatpush.msra.mxu0 0.0
      %1701 = vmatpush.msra.mxu0 0.0
      %1702 = vmatpush.msra.mxu0 0.0
      %1703 = vmatpush.msra.mxu0 0.0
      %1704 = vmatpush.msra.mxu0 0.0
      %1705 = vmatpush.msra.mxu0 0.0
      %1706 = vmatpush.msra.mxu0 %v1684
      %1707 = vmatmul.f32.gmra.mxu0 %v1689
      %v1708 = vpop.f32.mrf.mxu0
      %v1709 = vadd.f32 0.0, %v1708
      %1710 = vdwg.mxu0
      %1711 = vmatpush.msra.mxu0 0.0
      %1712 = vmatpush.msra.mxu0 0.0
      %1713 = vmatpush.msra.mxu0 0.0
      %1714 = vmatpush.msra.mxu0 0.0
      %1715 = vmatpush.msra.mxu0 0.0
      %1716 = vmatpush.msra.mxu0 0.0
      %1717 = vmatpush.msra.mxu0 0.0
      %1718 = vmatpush.msra.mxu0 0.0
      %1719 = vmatpush.msra.mxu0 0.0
      %1720 = vmatpush.msra.mxu0 0.0
      %1721 = vmatpush.msra.mxu0 0.0
      %1722 = vmatpush.msra.mxu0 0.0
      %1723 = vmatpush.msra.mxu0 0.0
      %1724 = vmatpush.msra.mxu0 0.0
      %1725 = vmatpush.msra.mxu0 0.0
      %1726 = vmatpush.msra.mxu0 %v1685
      %1727 = vmatmul.f32.gmra.mxu0 %v1689
      %v1728 = vpop.f32.mrf.mxu0
      %v1729 = vadd.f32 0.0, %v1728
      %1730 = vdwg.mxu0
      %1731 = vrot.lane.b32.xlu0 %v965, 126
      %v1732 = vpop.permute.xlu0 %1731
      %1733 = vrot.lane.b32.xlu0 %v962, 126
      %v1734 = vpop.permute.xlu0 %1733
      %1735 = vrot.lane.b32.xlu0 %v966, 126
      %v1736 = vpop.permute.xlu0 %1735
      %v1737 = vsel %vm1683, %v1732, %v1734
      %v1738 = vsel %vm1683, %v1734, %v1736
      %v1740 = vsel %vm1025, %v1674, 0
      %v1742 = vsel %vm1029, %v1737, 0
      %v1744 = vsel %vm1029, %v1738, 0
      %1746 = vmatpush.msra.mxu0 0.0
      %1747 = vmatpush.msra.mxu0 0.0
      %1748 = vmatpush.msra.mxu0 0.0
      %1749 = vmatpush.msra.mxu0 0.0
      %1750 = vmatpush.msra.mxu0 0.0
      %1751 = vmatpush.msra.mxu0 0.0
      %1752 = vmatpush.msra.mxu0 0.0
      %1753 = vmatpush.msra.mxu0 0.0
      %1754 = vmatpush.msra.mxu0 0.0
      %1755 = vmatpush.msra.mxu0 0.0
      %1756 = vmatpush.msra.mxu0 0.0
      %1757 = vmatpush.msra.mxu0 0.0
      %1758 = vmatpush.msra.mxu0 0.0
      %1759 = vmatpush.msra.mxu0 0.0
      %1760 = vmatpush.msra.mxu0 0.0
      %1761 = vmatpush.msra.mxu0 %v1742
      %1762 = vmatmul.f32.gmra.mxu0 %v1740
      %v1763 = vpop.f32.mrf.mxu0
      %v1764 = vadd.f32 %v1709, %v1763
      %1765 = vdwg.mxu0
      %1766 = vmatpush.msra.mxu0 0.0
      %1767 = vmatpush.msra.mxu0 0.0
      %1768 = vmatpush.msra.mxu0 0.0
      %1769 = vmatpush.msra.mxu0 0.0
      %1770 = vmatpush.msra.mxu0 0.0
      %1771 = vmatpush.msra.mxu0 0.0
      %1772 = vmatpush.msra.mxu0 0.0
      %1773 = vmatpush.msra.mxu0 0.0
      %1774 = vmatpush.msra.mxu0 0.0
      %1775 = vmatpush.msra.mxu0 0.0
      %1776 = vmatpush.msra.mxu0 0.0
      %1777 = vmatpush.msra.mxu0 0.0
      %1778 = vmatpush.msra.mxu0 0.0
      %1779 = vmatpush.msra.mxu0 0.0
      %1780 = vmatpush.msra.mxu0 0.0
      %1781 = vmatpush.msra.mxu0 %v1744
      %1782 = vmatmul.f32.gmra.mxu0 %v1740
      %v1783 = vpop.f32.mrf.mxu0
      %v1784 = vadd.f32 %v1729, %v1783
      %1785 = vdwg.mxu0
      %s1786 = scalar_lea.vmem %s5, 20
      %v1787 = vld [vmem:[%s1786] sm:$0xf]
      %1788 = vrot.lane.b32.xlu0 %v965, 110
      %v1789 = vpop.permute.xlu0 %1788
      %1790 = vrot.lane.b32.xlu0 %v962, 110
      %v1791 = vpop.permute.xlu0 %1790
      %1792 = vrot.lane.b32.xlu0 %v966, 110
      %v1793 = vpop.permute.xlu0 %1792
      %vm1794 = vcmask 900096
      %v1795 = vsel %vm1794, %v1789, %v1791
      %v1796 = vsel %vm1794, %v1791, %v1793
      %v1798 = vsel %vm1025, %v1787, 0
      %v1800 = vsel %vm1029, %v1795, 0
      %v1802 = vsel %vm1029, %v1796, 0
      %1804 = vmatpush.msra.mxu0 0.0
      %1805 = vmatpush.msra.mxu0 0.0
      %1806 = vmatpush.msra.mxu0 0.0
      %1807 = vmatpush.msra.mxu0 0.0
      %1808 = vmatpush.msra.mxu0 0.0
      %1809 = vmatpush.msra.mxu0 0.0
      %1810 = vmatpush.msra.mxu0 0.0
      %1811 = vmatpush.msra.mxu0 0.0
      %1812 = vmatpush.msra.mxu0 0.0
      %1813 = vmatpush.msra.mxu0 0.0
      %1814 = vmatpush.msra.mxu0 0.0
      %1815 = vmatpush.msra.mxu0 0.0
      %1816 = vmatpush.msra.mxu0 0.0
      %1817 = vmatpush.msra.mxu0 0.0
      %1818 = vmatpush.msra.mxu0 0.0
      %1819 = vmatpush.msra.mxu0 %v1800
      %1820 = vmatmul.f32.gmra.mxu0 %v1798
      %v1821 = vpop.f32.mrf.mxu0
      %v1822 = vadd.f32 0.0, %v1821
      %1823 = vdwg.mxu0
      %1824 = vmatpush.msra.mxu0 0.0
      %1825 = vmatpush.msra.mxu0 0.0
      %1826 = vmatpush.msra.mxu0 0.0
      %1827 = vmatpush.msra.mxu0 0.0
      %1828 = vmatpush.msra.mxu0 0.0
      %1829 = vmatpush.msra.mxu0 0.0
      %1830 = vmatpush.msra.mxu0 0.0
      %1831 = vmatpush.msra.mxu0 0.0
      %1832 = vmatpush.msra.mxu0 0.0
      %1833 = vmatpush.msra.mxu0 0.0
      %1834 = vmatpush.msra.mxu0 0.0
      %1835 = vmatpush.msra.mxu0 0.0
      %1836 = vmatpush.msra.mxu0 0.0
      %1837 = vmatpush.msra.mxu0 0.0
      %1838 = vmatpush.msra.mxu0 0.0
      %1839 = vmatpush.msra.mxu0 %v1802
      %1840 = vmatmul.f32.gmra.mxu0 %v1798
      %v1841 = vpop.f32.mrf.mxu0
      %v1842 = vadd.f32 0.0, %v1841
      %1843 = vdwg.mxu0
      %v1844 = vadd.f32 %v1764, %v1822
      %v1845 = vadd.f32 %v1784, %v1842
      %s1846 = scalar_lea.vmem %s6, 20
      %v1847 = vld [vmem:[%s1846] sm:$0xf]
      %1848 = vrot.lane.b32.xlu0 %v977, 110
      %v1849 = vpop.permute.xlu0 %1848
      %1850 = vrot.lane.b32.xlu0 %v973, 110
      %v1851 = vpop.permute.xlu0 %1850
      %1852 = vrot.lane.b32.xlu0 %v978, 110
      %v1853 = vpop.permute.xlu0 %1852
      %v1854 = vsel %vm1794, %v1849, %v1851
      %v1855 = vsel %vm1794, %v1851, %v1853
      %v1859 = vsel %vm392, %v1847, 0
      %1861 = vmatpush.msra.mxu0 0.0
      %1862 = vmatpush.msra.mxu0 0.0
      %1863 = vmatpush.msra.mxu0 0.0
      %1864 = vmatpush.msra.mxu0 0.0
      %1865 = vmatpush.msra.mxu0 0.0
      %1866 = vmatpush.msra.mxu0 0.0
      %1867 = vmatpush.msra.mxu0 0.0
      %1868 = vmatpush.msra.mxu0 0.0
      %1869 = vmatpush.msra.mxu0 0.0
      %1870 = vmatpush.msra.mxu0 0.0
      %1871 = vmatpush.msra.mxu0 0.0
      %1872 = vmatpush.msra.mxu0 0.0
      %1873 = vmatpush.msra.mxu0 0.0
      %1874 = vmatpush.msra.mxu0 0.0
      %1875 = vmatpush.msra.mxu0 0.0
      %1876 = vmatpush.msra.mxu0 %v1854
      %1877 = vmatmul.f32.gmra.mxu0 %v1859
      %v1878 = vpop.f32.mrf.mxu0
      %v1879 = vadd.f32 0.0, %v1878
      %1880 = vdwg.mxu0
      %1881 = vmatpush.msra.mxu0 0.0
      %1882 = vmatpush.msra.mxu0 0.0
      %1883 = vmatpush.msra.mxu0 0.0
      %1884 = vmatpush.msra.mxu0 0.0
      %1885 = vmatpush.msra.mxu0 0.0
      %1886 = vmatpush.msra.mxu0 0.0
      %1887 = vmatpush.msra.mxu0 0.0
      %1888 = vmatpush.msra.mxu0 0.0
      %1889 = vmatpush.msra.mxu0 0.0
      %1890 = vmatpush.msra.mxu0 0.0
      %1891 = vmatpush.msra.mxu0 0.0
      %1892 = vmatpush.msra.mxu0 0.0
      %1893 = vmatpush.msra.mxu0 0.0
      %1894 = vmatpush.msra.mxu0 0.0
      %1895 = vmatpush.msra.mxu0 0.0
      %1896 = vmatpush.msra.mxu0 %v1855
      %1897 = vmatmul.f32.gmra.mxu0 %v1859
      %v1898 = vpop.f32.mrf.mxu0
      %v1899 = vadd.f32 0.0, %v1898
      %1900 = vdwg.mxu0
      %v1901 = vadd.f32 %v1844, %v1879
      %v1902 = vadd.f32 %v1845, %v1899
      %s1903 = scalar_lea.vmem %s5, 32
      %v1904 = vld [vmem:[%s1903] sm:$0xf]
      %1905 = vrot.lane.b32.xlu0 %v965, 94
      %v1906 = vpop.permute.xlu0 %1905
      %1907 = vrot.lane.b32.xlu0 %v962, 94
      %v1908 = vpop.permute.xlu0 %1907
      %1909 = vrot.lane.b32.xlu0 %v966, 94
      %v1910 = vpop.permute.xlu0 %1909
      %vm1911 = vcmask 769024
      %v1912 = vsel %vm1911, %v1906, %v1908
      %v1913 = vsel %vm1911, %v1908, %v1910
      %v1915 = vsel %vm1025, %v1904, 0
      %v1917 = vsel %vm1029, %v1912, 0
      %v1919 = vsel %vm1029, %v1913, 0
      %1921 = vmatpush.msra.mxu0 0.0
      %1922 = vmatpush.msra.mxu0 0.0
      %1923 = vmatpush.msra.mxu0 0.0
      %1924 = vmatpush.msra.mxu0 0.0
      %1925 = vmatpush.msra.mxu0 0.0
      %1926 = vmatpush.msra.mxu0 0.0
      %1927 = vmatpush.msra.mxu0 0.0
      %1928 = vmatpush.msra.mxu0 0.0
      %1929 = vmatpush.msra.mxu0 0.0
      %1930 = vmatpush.msra.mxu0 0.0
      %1931 = vmatpush.msra.mxu0 0.0
      %1932 = vmatpush.msra.mxu0 0.0
      %1933 = vmatpush.msra.mxu0 0.0
      %1934 = vmatpush.msra.mxu0 0.0
      %1935 = vmatpush.msra.mxu0 0.0
      %1936 = vmatpush.msra.mxu0 %v1917
      %1937 = vmatmul.f32.gmra.mxu0 %v1915
      %v1938 = vpop.f32.mrf.mxu0
      %v1939 = vadd.f32 0.0, %v1938
      %1940 = vdwg.mxu0
      %1941 = vmatpush.msra.mxu0 0.0
      %1942 = vmatpush.msra.mxu0 0.0
      %1943 = vmatpush.msra.mxu0 0.0
      %1944 = vmatpush.msra.mxu0 0.0
      %1945 = vmatpush.msra.mxu0 0.0
      %1946 = vmatpush.msra.mxu0 0.0
      %1947 = vmatpush.msra.mxu0 0.0
      %1948 = vmatpush.msra.mxu0 0.0
      %1949 = vmatpush.msra.mxu0 0.0
      %1950 = vmatpush.msra.mxu0 0.0
      %1951 = vmatpush.msra.mxu0 0.0
      %1952 = vmatpush.msra.mxu0 0.0
      %1953 = vmatpush.msra.mxu0 0.0
      %1954 = vmatpush.msra.mxu0 0.0
      %1955 = vmatpush.msra.mxu0 0.0
      %1956 = vmatpush.msra.mxu0 %v1919
      %1957 = vmatmul.f32.gmra.mxu0 %v1915
      %v1958 = vpop.f32.mrf.mxu0
      %v1959 = vadd.f32 0.0, %v1958
      %1960 = vdwg.mxu0
      %v1961 = vadd.f32 %v1901, %v1939
      %v1962 = vadd.f32 %v1902, %v1959
      %s1963 = scalar_lea.vmem %s6, 32
      %v1964 = vld [vmem:[%s1963] sm:$0xf]
      %1965 = vrot.lane.b32.xlu0 %v977, 94
      %v1966 = vpop.permute.xlu0 %1965
      %1967 = vrot.lane.b32.xlu0 %v973, 94
      %v1968 = vpop.permute.xlu0 %1967
      %1969 = vrot.lane.b32.xlu0 %v978, 94
      %v1970 = vpop.permute.xlu0 %1969
      %v1971 = vsel %vm1911, %v1966, %v1968
      %v1972 = vsel %vm1911, %v1968, %v1970
      %v1976 = vsel %vm392, %v1964, 0
      %1978 = vmatpush.msra.mxu0 0.0
      %1979 = vmatpush.msra.mxu0 0.0
      %1980 = vmatpush.msra.mxu0 0.0
      %1981 = vmatpush.msra.mxu0 0.0
      %1982 = vmatpush.msra.mxu0 0.0
      %1983 = vmatpush.msra.mxu0 0.0
      %1984 = vmatpush.msra.mxu0 0.0
      %1985 = vmatpush.msra.mxu0 0.0
      %1986 = vmatpush.msra.mxu0 0.0
      %1987 = vmatpush.msra.mxu0 0.0
      %1988 = vmatpush.msra.mxu0 0.0
      %1989 = vmatpush.msra.mxu0 0.0
      %1990 = vmatpush.msra.mxu0 0.0
      %1991 = vmatpush.msra.mxu0 0.0
      %1992 = vmatpush.msra.mxu0 0.0
      %1993 = vmatpush.msra.mxu0 %v1971
      %1994 = vmatmul.f32.gmra.mxu0 %v1976
      %v1995 = vpop.f32.mrf.mxu0
      %v1996 = vadd.f32 0.0, %v1995
      %1997 = vdwg.mxu0
      %1998 = vmatpush.msra.mxu0 0.0
      %1999 = vmatpush.msra.mxu0 0.0
      %2000 = vmatpush.msra.mxu0 0.0
      %2001 = vmatpush.msra.mxu0 0.0
      %2002 = vmatpush.msra.mxu0 0.0
      %2003 = vmatpush.msra.mxu0 0.0
      %2004 = vmatpush.msra.mxu0 0.0
      %2005 = vmatpush.msra.mxu0 0.0
      %2006 = vmatpush.msra.mxu0 0.0
      %2007 = vmatpush.msra.mxu0 0.0
      %2008 = vmatpush.msra.mxu0 0.0
      %2009 = vmatpush.msra.mxu0 0.0
      %2010 = vmatpush.msra.mxu0 0.0
      %2011 = vmatpush.msra.mxu0 0.0
      %2012 = vmatpush.msra.mxu0 0.0
      %2013 = vmatpush.msra.mxu0 %v1972
      %2014 = vmatmul.f32.gmra.mxu0 %v1976
      %v2015 = vpop.f32.mrf.mxu0
      %v2016 = vadd.f32 0.0, %v2015
      %2017 = vdwg.mxu0
      %v2018 = vadd.f32 %v1961, %v1996
      %v2019 = vadd.f32 %v1962, %v2016
      %v2021 = vperm.slane %v382, 0
      %v2022 = vperm.slane %v382, 1
      %v2025 = vmul.f32 %v2018, %v2021
      %v2026 = vmul.f32 %v2019, %v2022
      %v2027 = vadd.f32 %v1671, %v2025
      %v2028 = vadd.f32 %v1672, %v2026
      %v2029 = vmax.f32 %v2027, 0.0
      %v2030 = vmax.f32 %v2028, 0.0
      %2033 = vrot.lane.b32.xlu0 %v2029, 17
      %v2034 = vpop.permute.xlu0 %2033
      %2035 = vrot.lane.b32.xlu0 %v2030, 17
      %v2036 = vpop.permute.xlu0 %2035
      %v2037 = vsel %vm961, %v2034, %v2036
      %v2040 = vsel %vm961, 0.0, %v2034
      %v2041 = vsel %vm961, %v2036, 0.0
      %v2042 = vld [vmem:[%s9] sm:$0xf]
      %v2043 = vld [vmem:[%s8] sm:$0xf]
      %s2044 = scalar_lea.vmem %s8, 12
      %v2045 = vld [vmem:[%s2044] sm:$0xf]
      %2048 = vrot.lane.b32.xlu0 %v2040, 112
      %v2049 = vpop.permute.xlu0 %2048
      %2050 = vrot.lane.b32.xlu0 %v2037, 112
      %v2051 = vpop.permute.xlu0 %2050
      %2052 = vrot.lane.b32.xlu0 %v2041, 112
      %v2053 = vpop.permute.xlu0 %2052
      %v2054 = vsel %vm943, %v2049, %v2051
      %v2055 = vsel %vm943, %v2051, %v2053
      %v2057 = vsel %vm1025, %v2045, 0
      %v2059 = vsel %vm1029, %v2054, 0
      %v2061 = vsel %vm1029, %v2055, 0
      %2063 = vmatpush.msra.mxu0 0.0
      %2064 = vmatpush.msra.mxu0 0.0
      %2065 = vmatpush.msra.mxu0 0.0
      %2066 = vmatpush.msra.mxu0 0.0
      %2067 = vmatpush.msra.mxu0 0.0
      %2068 = vmatpush.msra.mxu0 0.0
      %2069 = vmatpush.msra.mxu0 0.0
      %2070 = vmatpush.msra.mxu0 0.0
      %2071 = vmatpush.msra.mxu0 0.0
      %2072 = vmatpush.msra.mxu0 0.0
      %2073 = vmatpush.msra.mxu0 0.0
      %2074 = vmatpush.msra.mxu0 0.0
      %2075 = vmatpush.msra.mxu0 0.0
      %2076 = vmatpush.msra.mxu0 0.0
      %2077 = vmatpush.msra.mxu0 0.0
      %2078 = vmatpush.msra.mxu0 %v2059
      %2079 = vmatmul.f32.gmra.mxu0 %v2057
      %v2080 = vpop.f32.mrf.mxu0
      %v2081 = vadd.f32 0.0, %v2080
      %2082 = vdwg.mxu0
      %2083 = vmatpush.msra.mxu0 0.0
      %2084 = vmatpush.msra.mxu0 0.0
      %2085 = vmatpush.msra.mxu0 0.0
      %2086 = vmatpush.msra.mxu0 0.0
      %2087 = vmatpush.msra.mxu0 0.0
      %2088 = vmatpush.msra.mxu0 0.0
      %2089 = vmatpush.msra.mxu0 0.0
      %2090 = vmatpush.msra.mxu0 0.0
      %2091 = vmatpush.msra.mxu0 0.0
      %2092 = vmatpush.msra.mxu0 0.0
      %2093 = vmatpush.msra.mxu0 0.0
      %2094 = vmatpush.msra.mxu0 0.0
      %2095 = vmatpush.msra.mxu0 0.0
      %2096 = vmatpush.msra.mxu0 0.0
      %2097 = vmatpush.msra.mxu0 0.0
      %2098 = vmatpush.msra.mxu0 %v2061
      %2099 = vmatmul.f32.gmra.mxu0 %v2057
      %v2100 = vpop.f32.mrf.mxu0
      %v2101 = vadd.f32 0.0, %v2100
      %2102 = vdwg.mxu0
      %v2104 = vsel %vm1025, %v2043, 0
      %v2106 = vsel %vm1029, %v2040, 0
      %v2108 = vsel %vm1029, %v2037, 0
      %2110 = vmatpush.msra.mxu0 0.0
      %2111 = vmatpush.msra.mxu0 0.0
      %2112 = vmatpush.msra.mxu0 0.0
      %2113 = vmatpush.msra.mxu0 0.0
      %2114 = vmatpush.msra.mxu0 0.0
      %2115 = vmatpush.msra.mxu0 0.0
      %2116 = vmatpush.msra.mxu0 0.0
      %2117 = vmatpush.msra.mxu0 0.0
      %2118 = vmatpush.msra.mxu0 0.0
      %2119 = vmatpush.msra.mxu0 0.0
      %2120 = vmatpush.msra.mxu0 0.0
      %2121 = vmatpush.msra.mxu0 0.0
      %2122 = vmatpush.msra.mxu0 0.0
      %2123 = vmatpush.msra.mxu0 0.0
      %2124 = vmatpush.msra.mxu0 0.0
      %2125 = vmatpush.msra.mxu0 %v2106
      %2126 = vmatmul.f32.gmra.mxu0 %v2104
      %v2127 = vpop.f32.mrf.mxu0
      %v2128 = vadd.f32 %v2081, %v2127
      %2129 = vdwg.mxu0
      %2130 = vmatpush.msra.mxu0 0.0
      %2131 = vmatpush.msra.mxu0 0.0
      %2132 = vmatpush.msra.mxu0 0.0
      %2133 = vmatpush.msra.mxu0 0.0
      %2134 = vmatpush.msra.mxu0 0.0
      %2135 = vmatpush.msra.mxu0 0.0
      %2136 = vmatpush.msra.mxu0 0.0
      %2137 = vmatpush.msra.mxu0 0.0
      %2138 = vmatpush.msra.mxu0 0.0
      %2139 = vmatpush.msra.mxu0 0.0
      %2140 = vmatpush.msra.mxu0 0.0
      %2141 = vmatpush.msra.mxu0 0.0
      %2142 = vmatpush.msra.mxu0 0.0
      %2143 = vmatpush.msra.mxu0 0.0
      %2144 = vmatpush.msra.mxu0 0.0
      %2145 = vmatpush.msra.mxu0 %v2108
      %2146 = vmatmul.f32.gmra.mxu0 %v2104
      %v2147 = vpop.f32.mrf.mxu0
      %v2148 = vadd.f32 %v2101, %v2147
      %2149 = vdwg.mxu0
      %s2150 = scalar_lea.vmem %s8, 24
      %v2151 = vld [vmem:[%s2150] sm:$0xf]
      %2152 = vrot.lane.b32.xlu0 %v2040, 96
      %v2153 = vpop.permute.xlu0 %2152
      %2154 = vrot.lane.b32.xlu0 %v2037, 96
      %v2155 = vpop.permute.xlu0 %2154
      %2156 = vrot.lane.b32.xlu0 %v2041, 96
      %v2157 = vpop.permute.xlu0 %2156
      %v2158 = vsel %vm941, %v2153, %v2155
      %v2159 = vsel %vm941, %v2155, %v2157
      %v2161 = vsel %vm1025, %v2151, 0
      %v2163 = vsel %vm1029, %v2158, 0
      %v2165 = vsel %vm1029, %v2159, 0
      %2167 = vmatpush.msra.mxu0 0.0
      %2168 = vmatpush.msra.mxu0 0.0
      %2169 = vmatpush.msra.mxu0 0.0
      %2170 = vmatpush.msra.mxu0 0.0
      %2171 = vmatpush.msra.mxu0 0.0
      %2172 = vmatpush.msra.mxu0 0.0
      %2173 = vmatpush.msra.mxu0 0.0
      %2174 = vmatpush.msra.mxu0 0.0
      %2175 = vmatpush.msra.mxu0 0.0
      %2176 = vmatpush.msra.mxu0 0.0
      %2177 = vmatpush.msra.mxu0 0.0
      %2178 = vmatpush.msra.mxu0 0.0
      %2179 = vmatpush.msra.mxu0 0.0
      %2180 = vmatpush.msra.mxu0 0.0
      %2181 = vmatpush.msra.mxu0 0.0
      %2182 = vmatpush.msra.mxu0 %v2163
      %2183 = vmatmul.f32.gmra.mxu0 %v2161
      %v2184 = vpop.f32.mrf.mxu0
      %v2185 = vadd.f32 0.0, %v2184
      %2186 = vdwg.mxu0
      %2187 = vmatpush.msra.mxu0 0.0
      %2188 = vmatpush.msra.mxu0 0.0
      %2189 = vmatpush.msra.mxu0 0.0
      %2190 = vmatpush.msra.mxu0 0.0
      %2191 = vmatpush.msra.mxu0 0.0
      %2192 = vmatpush.msra.mxu0 0.0
      %2193 = vmatpush.msra.mxu0 0.0
      %2194 = vmatpush.msra.mxu0 0.0
      %2195 = vmatpush.msra.mxu0 0.0
      %2196 = vmatpush.msra.mxu0 0.0
      %2197 = vmatpush.msra.mxu0 0.0
      %2198 = vmatpush.msra.mxu0 0.0
      %2199 = vmatpush.msra.mxu0 0.0
      %2200 = vmatpush.msra.mxu0 0.0
      %2201 = vmatpush.msra.mxu0 0.0
      %2202 = vmatpush.msra.mxu0 %v2165
      %2203 = vmatmul.f32.gmra.mxu0 %v2161
      %v2204 = vpop.f32.mrf.mxu0
      %v2205 = vadd.f32 0.0, %v2204
      %2206 = vdwg.mxu0
      %v2207 = vadd.f32 %v2128, %v2185
      %v2208 = vadd.f32 %v2148, %v2205
      %v2209 = vmul.f32 %v2207, %v1311
      %v2210 = vmul.f32 %v2208, %v1312
      %2212 = vset.pattern.permute.xlu0 0
      %2213 = vperm.xlu0 %2212, %v2042
      %v2214 = vpop.permute.xlu0 %2213
      %v2216 = vadd.f32 %v2214, %v2209
      %v2217 = vadd.f32 %v2214, %v2210
      %s2218 = scalar_lea.vmem %s8, 4
      %v2219 = vld [vmem:[%s2218] sm:$0xf]
      %s2220 = scalar_lea.vmem %s8, 16
      %v2221 = vld [vmem:[%s2220] sm:$0xf]
      %2222 = vrot.lane.b32.xlu0 %v2040, 111
      %v2223 = vpop.permute.xlu0 %2222
      %2224 = vrot.lane.b32.xlu0 %v2037, 111
      %v2225 = vpop.permute.xlu0 %2224
      %2226 = vrot.lane.b32.xlu0 %v2041, 111
      %v2227 = vpop.permute.xlu0 %2226
      %v2228 = vsel %vm1445, %v2223, %v2225
      %v2229 = vsel %vm1445, %v2225, %v2227
      %v2231 = vsel %vm1025, %v2221, 0
      %v2233 = vsel %vm1029, %v2228, 0
      %v2235 = vsel %vm1029, %v2229, 0
      %2237 = vmatpush.msra.mxu0 0.0
      %2238 = vmatpush.msra.mxu0 0.0
      %2239 = vmatpush.msra.mxu0 0.0
      %2240 = vmatpush.msra.mxu0 0.0
      %2241 = vmatpush.msra.mxu0 0.0
      %2242 = vmatpush.msra.mxu0 0.0
      %2243 = vmatpush.msra.mxu0 0.0
      %2244 = vmatpush.msra.mxu0 0.0
      %2245 = vmatpush.msra.mxu0 0.0
      %2246 = vmatpush.msra.mxu0 0.0
      %2247 = vmatpush.msra.mxu0 0.0
      %2248 = vmatpush.msra.mxu0 0.0
      %2249 = vmatpush.msra.mxu0 0.0
      %2250 = vmatpush.msra.mxu0 0.0
      %2251 = vmatpush.msra.mxu0 0.0
      %2252 = vmatpush.msra.mxu0 %v2233
      %2253 = vmatmul.f32.gmra.mxu0 %v2231
      %v2254 = vpop.f32.mrf.mxu0
      %v2255 = vadd.f32 0.0, %v2254
      %2256 = vdwg.mxu0
      %2257 = vmatpush.msra.mxu0 0.0
      %2258 = vmatpush.msra.mxu0 0.0
      %2259 = vmatpush.msra.mxu0 0.0
      %2260 = vmatpush.msra.mxu0 0.0
      %2261 = vmatpush.msra.mxu0 0.0
      %2262 = vmatpush.msra.mxu0 0.0
      %2263 = vmatpush.msra.mxu0 0.0
      %2264 = vmatpush.msra.mxu0 0.0
      %2265 = vmatpush.msra.mxu0 0.0
      %2266 = vmatpush.msra.mxu0 0.0
      %2267 = vmatpush.msra.mxu0 0.0
      %2268 = vmatpush.msra.mxu0 0.0
      %2269 = vmatpush.msra.mxu0 0.0
      %2270 = vmatpush.msra.mxu0 0.0
      %2271 = vmatpush.msra.mxu0 0.0
      %2272 = vmatpush.msra.mxu0 %v2235
      %2273 = vmatmul.f32.gmra.mxu0 %v2231
      %v2274 = vpop.f32.mrf.mxu0
      %v2275 = vadd.f32 0.0, %v2274
      %2276 = vdwg.mxu0
      %2277 = vrot.lane.b32.xlu0 %v2040, 127
      %v2278 = vpop.permute.xlu0 %2277
      %2279 = vrot.lane.b32.xlu0 %v2037, 127
      %v2280 = vpop.permute.xlu0 %2279
      %2281 = vrot.lane.b32.xlu0 %v2041, 127
      %v2282 = vpop.permute.xlu0 %2281
      %v2283 = vsel %vm1334, %v2278, %v2280
      %v2284 = vsel %vm1334, %v2280, %v2282
      %v2286 = vsel %vm1025, %v2219, 0
      %v2288 = vsel %vm1029, %v2283, 0
      %v2290 = vsel %vm1029, %v2284, 0
      %2292 = vmatpush.msra.mxu0 0.0
      %2293 = vmatpush.msra.mxu0 0.0
      %2294 = vmatpush.msra.mxu0 0.0
      %2295 = vmatpush.msra.mxu0 0.0
      %2296 = vmatpush.msra.mxu0 0.0
      %2297 = vmatpush.msra.mxu0 0.0
      %2298 = vmatpush.msra.mxu0 0.0
      %2299 = vmatpush.msra.mxu0 0.0
      %2300 = vmatpush.msra.mxu0 0.0
      %2301 = vmatpush.msra.mxu0 0.0
      %2302 = vmatpush.msra.mxu0 0.0
      %2303 = vmatpush.msra.mxu0 0.0
      %2304 = vmatpush.msra.mxu0 0.0
      %2305 = vmatpush.msra.mxu0 0.0
      %2306 = vmatpush.msra.mxu0 0.0
      %2307 = vmatpush.msra.mxu0 %v2288
      %2308 = vmatmul.f32.gmra.mxu0 %v2286
      %v2309 = vpop.f32.mrf.mxu0
      %v2310 = vadd.f32 %v2255, %v2309
      %2311 = vdwg.mxu0
      %2312 = vmatpush.msra.mxu0 0.0
      %2313 = vmatpush.msra.mxu0 0.0
      %2314 = vmatpush.msra.mxu0 0.0
      %2315 = vmatpush.msra.mxu0 0.0
      %2316 = vmatpush.msra.mxu0 0.0
      %2317 = vmatpush.msra.mxu0 0.0
      %2318 = vmatpush.msra.mxu0 0.0
      %2319 = vmatpush.msra.mxu0 0.0
      %2320 = vmatpush.msra.mxu0 0.0
      %2321 = vmatpush.msra.mxu0 0.0
      %2322 = vmatpush.msra.mxu0 0.0
      %2323 = vmatpush.msra.mxu0 0.0
      %2324 = vmatpush.msra.mxu0 0.0
      %2325 = vmatpush.msra.mxu0 0.0
      %2326 = vmatpush.msra.mxu0 0.0
      %2327 = vmatpush.msra.mxu0 %v2290
      %2328 = vmatmul.f32.gmra.mxu0 %v2286
      %v2329 = vpop.f32.mrf.mxu0
      %v2330 = vadd.f32 %v2275, %v2329
      %2331 = vdwg.mxu0
      %s2332 = scalar_lea.vmem %s8, 28
      %v2333 = vld [vmem:[%s2332] sm:$0xf]
      %2334 = vrot.lane.b32.xlu0 %v2040, 95
      %v2335 = vpop.permute.xlu0 %2334
      %2336 = vrot.lane.b32.xlu0 %v2037, 95
      %v2337 = vpop.permute.xlu0 %2336
      %2338 = vrot.lane.b32.xlu0 %v2041, 95
      %v2339 = vpop.permute.xlu0 %2338
      %v2340 = vsel %vm1562, %v2335, %v2337
      %v2341 = vsel %vm1562, %v2337, %v2339
      %v2343 = vsel %vm1025, %v2333, 0
      %v2345 = vsel %vm1029, %v2340, 0
      %v2347 = vsel %vm1029, %v2341, 0
      %2349 = vmatpush.msra.mxu0 0.0
      %2350 = vmatpush.msra.mxu0 0.0
      %2351 = vmatpush.msra.mxu0 0.0
      %2352 = vmatpush.msra.mxu0 0.0
      %2353 = vmatpush.msra.mxu0 0.0
      %2354 = vmatpush.msra.mxu0 0.0
      %2355 = vmatpush.msra.mxu0 0.0
      %2356 = vmatpush.msra.mxu0 0.0
      %2357 = vmatpush.msra.mxu0 0.0
      %2358 = vmatpush.msra.mxu0 0.0
      %2359 = vmatpush.msra.mxu0 0.0
      %2360 = vmatpush.msra.mxu0 0.0
      %2361 = vmatpush.msra.mxu0 0.0
      %2362 = vmatpush.msra.mxu0 0.0
      %2363 = vmatpush.msra.mxu0 0.0
      %2364 = vmatpush.msra.mxu0 %v2345
      %2365 = vmatmul.f32.gmra.mxu0 %v2343
      %v2366 = vpop.f32.mrf.mxu0
      %v2367 = vadd.f32 0.0, %v2366
      %2368 = vdwg.mxu0
      %2369 = vmatpush.msra.mxu0 0.0
      %2370 = vmatpush.msra.mxu0 0.0
      %2371 = vmatpush.msra.mxu0 0.0
      %2372 = vmatpush.msra.mxu0 0.0
      %2373 = vmatpush.msra.mxu0 0.0
      %2374 = vmatpush.msra.mxu0 0.0
      %2375 = vmatpush.msra.mxu0 0.0
      %2376 = vmatpush.msra.mxu0 0.0
      %2377 = vmatpush.msra.mxu0 0.0
      %2378 = vmatpush.msra.mxu0 0.0
      %2379 = vmatpush.msra.mxu0 0.0
      %2380 = vmatpush.msra.mxu0 0.0
      %2381 = vmatpush.msra.mxu0 0.0
      %2382 = vmatpush.msra.mxu0 0.0
      %2383 = vmatpush.msra.mxu0 0.0
      %2384 = vmatpush.msra.mxu0 %v2347
      %2385 = vmatmul.f32.gmra.mxu0 %v2343
      %v2386 = vpop.f32.mrf.mxu0
      %v2387 = vadd.f32 0.0, %v2386
      %2388 = vdwg.mxu0
      %v2389 = vadd.f32 %v2310, %v2367
      %v2390 = vadd.f32 %v2330, %v2387
      %v2391 = vadd.f32 %v2216, %v2389
      %v2392 = vadd.f32 %v2217, %v2390
      %s2393 = scalar_lea.vmem %s8, 8
      %v2394 = vld [vmem:[%s2393] sm:$0xf]
      %s2395 = scalar_lea.vmem %s8, 20
      %v2396 = vld [vmem:[%s2395] sm:$0xf]
      %2397 = vrot.lane.b32.xlu0 %v2040, 110
      %v2398 = vpop.permute.xlu0 %2397
      %2399 = vrot.lane.b32.xlu0 %v2037, 110
      %v2400 = vpop.permute.xlu0 %2399
      %2401 = vrot.lane.b32.xlu0 %v2041, 110
      %v2402 = vpop.permute.xlu0 %2401
      %v2403 = vsel %vm1794, %v2398, %v2400
      %v2404 = vsel %vm1794, %v2400, %v2402
      %v2406 = vsel %vm1025, %v2396, 0
      %v2408 = vsel %vm1029, %v2403, 0
      %v2410 = vsel %vm1029, %v2404, 0
      %2412 = vmatpush.msra.mxu0 0.0
      %2413 = vmatpush.msra.mxu0 0.0
      %2414 = vmatpush.msra.mxu0 0.0
      %2415 = vmatpush.msra.mxu0 0.0
      %2416 = vmatpush.msra.mxu0 0.0
      %2417 = vmatpush.msra.mxu0 0.0
      %2418 = vmatpush.msra.mxu0 0.0
      %2419 = vmatpush.msra.mxu0 0.0
      %2420 = vmatpush.msra.mxu0 0.0
      %2421 = vmatpush.msra.mxu0 0.0
      %2422 = vmatpush.msra.mxu0 0.0
      %2423 = vmatpush.msra.mxu0 0.0
      %2424 = vmatpush.msra.mxu0 0.0
      %2425 = vmatpush.msra.mxu0 0.0
      %2426 = vmatpush.msra.mxu0 0.0
      %2427 = vmatpush.msra.mxu0 %v2408
      %2428 = vmatmul.f32.gmra.mxu0 %v2406
      %v2429 = vpop.f32.mrf.mxu0
      %v2430 = vadd.f32 0.0, %v2429
      %2431 = vdwg.mxu0
      %2432 = vmatpush.msra.mxu0 0.0
      %2433 = vmatpush.msra.mxu0 0.0
      %2434 = vmatpush.msra.mxu0 0.0
      %2435 = vmatpush.msra.mxu0 0.0
      %2436 = vmatpush.msra.mxu0 0.0
      %2437 = vmatpush.msra.mxu0 0.0
      %2438 = vmatpush.msra.mxu0 0.0
      %2439 = vmatpush.msra.mxu0 0.0
      %2440 = vmatpush.msra.mxu0 0.0
      %2441 = vmatpush.msra.mxu0 0.0
      %2442 = vmatpush.msra.mxu0 0.0
      %2443 = vmatpush.msra.mxu0 0.0
      %2444 = vmatpush.msra.mxu0 0.0
      %2445 = vmatpush.msra.mxu0 0.0
      %2446 = vmatpush.msra.mxu0 0.0
      %2447 = vmatpush.msra.mxu0 %v2410
      %2448 = vmatmul.f32.gmra.mxu0 %v2406
      %v2449 = vpop.f32.mrf.mxu0
      %v2450 = vadd.f32 0.0, %v2449
      %2451 = vdwg.mxu0
      %2452 = vrot.lane.b32.xlu0 %v2040, 126
      %v2453 = vpop.permute.xlu0 %2452
      %2454 = vrot.lane.b32.xlu0 %v2037, 126
      %v2455 = vpop.permute.xlu0 %2454
      %2456 = vrot.lane.b32.xlu0 %v2041, 126
      %v2457 = vpop.permute.xlu0 %2456
      %v2458 = vsel %vm1683, %v2453, %v2455
      %v2459 = vsel %vm1683, %v2455, %v2457
      %v2461 = vsel %vm1025, %v2394, 0
      %v2463 = vsel %vm1029, %v2458, 0
      %v2465 = vsel %vm1029, %v2459, 0
      %2467 = vmatpush.msra.mxu0 0.0
      %2468 = vmatpush.msra.mxu0 0.0
      %2469 = vmatpush.msra.mxu0 0.0
      %2470 = vmatpush.msra.mxu0 0.0
      %2471 = vmatpush.msra.mxu0 0.0
      %2472 = vmatpush.msra.mxu0 0.0
      %2473 = vmatpush.msra.mxu0 0.0
      %2474 = vmatpush.msra.mxu0 0.0
      %2475 = vmatpush.msra.mxu0 0.0
      %2476 = vmatpush.msra.mxu0 0.0
      %2477 = vmatpush.msra.mxu0 0.0
      %2478 = vmatpush.msra.mxu0 0.0
      %2479 = vmatpush.msra.mxu0 0.0
      %2480 = vmatpush.msra.mxu0 0.0
      %2481 = vmatpush.msra.mxu0 0.0
      %2482 = vmatpush.msra.mxu0 %v2463
      %2483 = vmatmul.f32.gmra.mxu0 %v2461
      %v2484 = vpop.f32.mrf.mxu0
      %v2485 = vadd.f32 %v2430, %v2484
      %2486 = vdwg.mxu0
      %2487 = vmatpush.msra.mxu0 0.0
      %2488 = vmatpush.msra.mxu0 0.0
      %2489 = vmatpush.msra.mxu0 0.0
      %2490 = vmatpush.msra.mxu0 0.0
      %2491 = vmatpush.msra.mxu0 0.0
      %2492 = vmatpush.msra.mxu0 0.0
      %2493 = vmatpush.msra.mxu0 0.0
      %2494 = vmatpush.msra.mxu0 0.0
      %2495 = vmatpush.msra.mxu0 0.0
      %2496 = vmatpush.msra.mxu0 0.0
      %2497 = vmatpush.msra.mxu0 0.0
      %2498 = vmatpush.msra.mxu0 0.0
      %2499 = vmatpush.msra.mxu0 0.0
      %2500 = vmatpush.msra.mxu0 0.0
      %2501 = vmatpush.msra.mxu0 0.0
      %2502 = vmatpush.msra.mxu0 %v2465
      %2503 = vmatmul.f32.gmra.mxu0 %v2461
      %v2504 = vpop.f32.mrf.mxu0
      %v2505 = vadd.f32 %v2450, %v2504
      %2506 = vdwg.mxu0
      %s2507 = scalar_lea.vmem %s8, 32
      %v2508 = vld [vmem:[%s2507] sm:$0xf]
      %2509 = vrot.lane.b32.xlu0 %v2040, 94
      %v2510 = vpop.permute.xlu0 %2509
      %2511 = vrot.lane.b32.xlu0 %v2037, 94
      %v2512 = vpop.permute.xlu0 %2511
      %2513 = vrot.lane.b32.xlu0 %v2041, 94
      %v2514 = vpop.permute.xlu0 %2513
      %v2515 = vsel %vm1911, %v2510, %v2512
      %v2516 = vsel %vm1911, %v2512, %v2514
      %v2518 = vsel %vm1025, %v2508, 0
      %v2520 = vsel %vm1029, %v2515, 0
      %v2522 = vsel %vm1029, %v2516, 0
      %2524 = vmatpush.msra.mxu0 0.0
      %2525 = vmatpush.msra.mxu0 0.0
      %2526 = vmatpush.msra.mxu0 0.0
      %2527 = vmatpush.msra.mxu0 0.0
      %2528 = vmatpush.msra.mxu0 0.0
      %2529 = vmatpush.msra.mxu0 0.0
      %2530 = vmatpush.msra.mxu0 0.0
      %2531 = vmatpush.msra.mxu0 0.0
      %2532 = vmatpush.msra.mxu0 0.0
      %2533 = vmatpush.msra.mxu0 0.0
      %2534 = vmatpush.msra.mxu0 0.0
      %2535 = vmatpush.msra.mxu0 0.0
      %2536 = vmatpush.msra.mxu0 0.0
      %2537 = vmatpush.msra.mxu0 0.0
      %2538 = vmatpush.msra.mxu0 0.0
      %2539 = vmatpush.msra.mxu0 %v2520
      %2540 = vmatmul.f32.gmra.mxu0 %v2518
      %v2541 = vpop.f32.mrf.mxu0
      %v2542 = vadd.f32 0.0, %v2541
      %2543 = vdwg.mxu0
      %2544 = vmatpush.msra.mxu0 0.0
      %2545 = vmatpush.msra.mxu0 0.0
      %2546 = vmatpush.msra.mxu0 0.0
      %2547 = vmatpush.msra.mxu0 0.0
      %2548 = vmatpush.msra.mxu0 0.0
      %2549 = vmatpush.msra.mxu0 0.0
      %2550 = vmatpush.msra.mxu0 0.0
      %2551 = vmatpush.msra.mxu0 0.0
      %2552 = vmatpush.msra.mxu0 0.0
      %2553 = vmatpush.msra.mxu0 0.0
      %2554 = vmatpush.msra.mxu0 0.0
      %2555 = vmatpush.msra.mxu0 0.0
      %2556 = vmatpush.msra.mxu0 0.0
      %2557 = vmatpush.msra.mxu0 0.0
      %2558 = vmatpush.msra.mxu0 0.0
      %2559 = vmatpush.msra.mxu0 %v2522
      %2560 = vmatmul.f32.gmra.mxu0 %v2518
      %v2561 = vpop.f32.mrf.mxu0
      %v2562 = vadd.f32 0.0, %v2561
      %2563 = vdwg.mxu0
      %v2564 = vadd.f32 %v2485, %v2542
      %v2565 = vadd.f32 %v2505, %v2562
      %v2566 = vmul.f32 %v2564, %v2021
      %v2567 = vmul.f32 %v2565, %v2022
      %v2568 = vadd.f32 %v2391, %v2566
      %v2569 = vadd.f32 %v2392, %v2567
      %v2570 = vmax.f32 %v2568, 0.0
      %v2571 = vmax.f32 %v2569, 0.0
      %v2574 = vrot.slane %v2571, 4
      %v2575 = vsel %vm1029, %v2570, %v2574
      %2577 = vst [vmem:[%s379] sm:$0xff] %v2575
      %p2578 = scmp.lt.s32.totalorder %s21, 1
      %s2579 = scalar_select %p2578, %s21, 1
      %s2580 = smul.addr %s2579, 2
      %s2581 = smul.addr %s2580, 4
      %s2582 = scalar_lea.vmem %s10, %s2581
      // Predicated region
      $region61: #{up_forward.1} parent=59 // pred_check
        %p2583 = pneg %p259
      $region62: #{up_forward.1} parent=59 // pred_check_branch
        %2585 = sbr.rel (%p2583) target = $region64
      $region63: #{up_forward.1} parent=59 // pred_region
        _
      $region64: #{up_forward.1} parent=59 // pred_fallthru
        _
    $region60: #{up_forward.1} parent=5 // pred_fallthru
      _
    %p2586 = scmp.le.s32.totalorder 2, %s16
    // Predicated region
    $region65: #{up_forward.1} parent=5 // pred_check
      %p2587 = pneg %p2586
    $region66: #{up_forward.1} parent=5 // pred_check_branch
      %2589 = sbr.rel (%p2587) target = $region68
    $region67: #{up_forward.1} parent=5 // pred_region
      %s2590 = ssub.s32 %s16, 2
      // Predicated region
      $region69: #{up_forward.1} parent=67 // pred_check
        %p2591 = pneg %p265
      $region70: #{up_forward.1} parent=67 // pred_check_branch
        %2593 = sbr.rel (%p2591) target = $region72
      $region71: #{up_forward.1} parent=67 // pred_region
        %p2594 = scmp.lt.s32.totalorder %s22, 1
        %s2595 = scalar_select %p2594, %s22, 1
        %s2596 = smul.addr %s2595, 2
        %s2597 = smul.addr %s2596, 4
        %s2598 = scalar_lea.vmem %s10, %s2597
      $region72: #{up_forward.1} parent=67 // pred_fallthru
        _
    $region68: #{up_forward.1} parent=5 // pred_fallthru
      _
  $region6: #{up_forward.1} parent=0 // loop_footer
    %s20 = sadd.s32 1, %s16
  $region7: #{up_forward.1} parent=0 // loop_footer_branch
    %15 = sbr.rel target = $region3
  $region8: #{up_forward.1} parent=0 // loop_exit
    _

</llo_original>
